<compile_context>
chip_gen: v7x
topology: tpu7x:2x2x1
jax: 0.10.0
libtpu: 0.0.40
codegen_flags: <defaults>
</compile_context>

<pallas_src>
import math

import jax
import jax.numpy as jnp
import numpy as np
from jax.experimental import pallas as pl
from jax.experimental.pallas import tpu as pltpu

PAD_ID = 0


# ---------------------------------------------------------------------------
# Fused kernel: embedding(max_norm) + one-hot gather + bi-GRU + Linear head
# ---------------------------------------------------------------------------
def _rnn_attn_kernel(tok_ref, emb_ref, wih_ref, whh_ref, bih_ref, bhh_ref,
                     wout_ref, bout_ref, o_ref):
    # tok_ref : (T*B, 1) int32   (row-major flatten of the (T, B) token matrix)
    # emb_ref : (V, E)  f32
    # wih_ref : (2, 3, E, H) f32   [direction, gate(r,z,n), in, hidden]
    # whh_ref : (2, 3, H, H) f32
    # bih_ref : (2, 3, 1, H) f32
    # bhh_ref : (2, 3, 1, H) f32
    # wout_ref: (2, H, 2) f32      [0] multiplies h_backward, [1] h_forward
    # bout_ref: (1, 2) f32
    # o_ref   : (B, 2) f32
    N = tok_ref.shape[0]
    V, E = emb_ref.shape
    H = whh_ref.shape[-1]
    B = o_ref.shape[0]
    T = N // B

    # --- nn.Embedding(max_norm=1): renorm rows whose L2 norm exceeds 1 -----
    tbl = emb_ref[...]                                            # (V, E)
    nrm = jnp.sqrt(jnp.sum(tbl * tbl, axis=1, keepdims=True))     # (V, 1)
    tbl = tbl * jnp.where(nrm > 1.0, 1.0 / (nrm + 1e-7), 1.0)

    # --- embedding lookup as a one-hot matmul on the MXU -------------------
    tok = tok_ref[...]                                            # (N, 1) int32
    oh = (jax.lax.broadcasted_iota(jnp.int32, (N, V), 1) == tok).astype(jnp.float32)
    x = jnp.dot(oh, tbl, preferred_element_type=jnp.float32)      # (N, E)

    # --- input-side gate pre-activations for ALL timesteps, both dirs ------
    # gi[d][g] : (N, H); gate order 0=r (reset), 1=z (update), 2=n (new)
    gi = [[jnp.dot(x, wih_ref[d, g], preferred_element_type=jnp.float32)
           + bih_ref[d, g]
           for g in range(3)] for d in range(2)]

    whh = [[whh_ref[d, g] for g in range(3)] for d in range(2)]
    bhh = [[bhh_ref[d, g] for g in range(3)] for d in range(2)]

    def gru_step(h, t, d):
        row = slice(t * B, (t + 1) * B)     # static, sublane-aligned (B mult of 8)
        ghr = jnp.dot(h, whh[d][0], preferred_element_type=jnp.float32) + bhh[d][0]
        ghz = jnp.dot(h, whh[d][1], preferred_element_type=jnp.float32) + bhh[d][1]
        ghn = jnp.dot(h, whh[d][2], preferred_element_type=jnp.float32) + bhh[d][2]
        r = jax.nn.sigmoid(gi[d][0][row] + ghr)
        z = jax.nn.sigmoid(gi[d][1][row] + ghz)
        n = jnp.tanh(gi[d][2][row] + r * ghn)
        return (1.0 - z) * n + z * h

    h_f = jnp.zeros((B, H), jnp.float32)    # GRU initial hidden = zeros
    h_b = jnp.zeros((B, H), jnp.float32)
    for t in range(T):                      # T = 2: static unroll
        h_f = gru_step(h_f, t, 0)           # forward direction
        h_b = gru_step(h_b, T - 1 - t, 1)   # backward direction

    # --- cat([hidden[-1], hidden[-2]], dim=1) @ W_out^T + b_out ------------
    # hidden[-1] == backward final, hidden[-2] == forward final.  The concat
    # is avoided by splitting W_out^T into its h_b / h_f halves.
    logits = (jnp.dot(h_b, wout_ref[0], preferred_element_type=jnp.float32)
              + jnp.dot(h_f, wout_ref[1], preferred_element_type=jnp.float32)
              + bout_ref[...])
    o_ref[...] = logits


def rnn_attn_forward(tokens, emb_table, wih, whh, bih, bhh, wout, bout):
    """tokens: (bs, sl) int32.  Returns (sl, 2) f32 (faithful to the module:
    the GRU is batch_first=False, so the token batch axis is treated as time)."""
    T, B = tokens.shape
    tok = tokens.reshape(T * B, 1).astype(jnp.int32)
    vmem = pl.BlockSpec(memory_space=pltpu.MemorySpace.VMEM)
    return pl.pallas_call(
        _rnn_attn_kernel,
        out_shape=jax.ShapeDtypeStruct((B, 2), jnp.float32),
        in_specs=[vmem] * 8,
        out_specs=vmem,
    )(tok, emb_table, wih, whh, bih, bhh, wout, bout)


# ---------------------------------------------------------------------------
# Pure-JAX reference (for correctness check)
# ---------------------------------------------------------------------------
def reference(tokens, emb_table, wih, whh, bih, bhh, wout, bout):
    T, B = tokens.shape
    H = whh.shape[-1]
    nrm = jnp.sqrt(jnp.sum(emb_table * emb_table, axis=1, keepdims=True))
    tbl = emb_table * jnp.where(nrm > 1.0, 1.0 / (nrm + 1e-7), 1.0)
    x = tbl[tokens]                                               # (T, B, E)

    def run_dir(d, order):
        h = jnp.zeros((B, H), jnp.float32)
        for t in order:
            xt = x[t]
            gir = xt @ wih[d, 0] + bih[d, 0]
            giz = xt @ wih[d, 1] + bih[d, 1]
            gin = xt @ wih[d, 2] + bih[d, 2]
            ghr = h @ whh[d, 0] + bhh[d, 0]
            ghz = h @ whh[d, 1] + bhh[d, 1]
            ghn = h @ whh[d, 2] + bhh[d, 2]
            r = jax.nn.sigmoid(gir + ghr)
            z = jax.nn.sigmoid(giz + ghz)
            n = jnp.tanh(gin + r * ghn)
            h = (1.0 - z) * n + z * h
        return h

    h_f = run_dir(0, range(T))
    h_b = run_dir(1, range(T - 1, -1, -1))
    return h_b @ wout[0] + h_f @ wout[1] + bout


if __name__ == "__main__":
    # Shapes implied by the module: tokens (bs=2, sl=16), emb_dim=10, hidden=50,
    # synthetic vocab of 128 with pad_token_id=0, 2 output classes.
    T, B = 2, 16          # (bs, sl) — GRU treats bs as time (see notes above)
    V, E, H = 128, 10, 50

    key = jax.random.PRNGKey(0)
    ks = jax.random.split(key, 8)

    # Embedding ~ N(0,1) (PyTorch default); row norms > 1 exercise max_norm renorm.
    emb_table = jax.random.normal(ks[0], (V, E), jnp.float32)
    emb_table = emb_table.at[PAD_ID].set(0.0)          # padding_idx row is zero

    bnd = 1.0 / math.sqrt(H)
    wih = jax.random.uniform(ks[1], (2, 3, E, H), jnp.float32, -bnd, bnd)
    whh = jax.random.uniform(ks[2], (2, 3, H, H), jnp.float32, -bnd, bnd)
    bih = jax.random.uniform(ks[3], (2, 3, 1, H), jnp.float32, -bnd, bnd)
    bhh = jax.random.uniform(ks[4], (2, 3, 1, H), jnp.float32, -bnd, bnd)

    bnd_o = 1.0 / math.sqrt(2 * H)
    wout = jax.random.uniform(ks[5], (2, H, 2), jnp.float32, -bnd_o, bnd_o)
    bout = jax.random.uniform(ks[6], (1, 2), jnp.float32, -bnd_o, bnd_o)

    tokens = jax.random.randint(ks[7], (T, B), 1, V, dtype=jnp.int32)
    tokens = tokens.at[0, 12:].set(PAD_ID)             # some pad tokens
    tokens = tokens.at[1, 10:].set(PAD_ID)

    fwd = jax.jit(rnn_attn_forward)
    out = jax.block_until_ready(fwd(tokens, emb_table, wih, whh, bih, bhh, wout, bout))

    ref = reference(tokens, emb_table, wih, whh, bih, bhh, wout, bout)
    assert out.shape == (B, 2), out.shape
    np.testing.assert_allclose(np.asarray(out), np.asarray(ref), rtol=1e-3, atol=1e-4)

    print("KERNEL_OK")
</pallas_src>

<mosaic_0001>
module attributes {stable_mosaic.version = 11 : i64} {
  func.func @_rnn_attn_kernel(%arg0: memref<32x1xi32, #tpu.memory_space<vmem>>, %arg1: memref<128x10xf32, #tpu.memory_space<vmem>>, %arg2: memref<2x3x10x50xf32, #tpu.memory_space<vmem>>, %arg3: memref<2x3x50x50xf32, #tpu.memory_space<vmem>>, %arg4: memref<2x3x1x50xf32, #tpu.memory_space<vmem>>, %arg5: memref<2x3x1x50xf32, #tpu.memory_space<vmem>>, %arg6: memref<2x50x2xf32, #tpu.memory_space<vmem>>, %arg7: memref<1x2xf32, #tpu.memory_space<vmem>>, %arg8: memref<16x2xf32, #tpu.memory_space<vmem>>) attributes {dimension_semantics = [], scalar_prefetch = 0 : i64, scratch_operands = 0 : i64, tpu.core_type = #tpu.core_type<tc>} {
    %c0 = arith.constant 0 : index
    %c0_0 = arith.constant 0 : index
    %0 = vector.load %arg1[%c0, %c0_0] : memref<128x10xf32, #tpu.memory_space<vmem>>, vector<128x10xf32>
    %1 = arith.mulf %0, %0 : vector<128x10xf32>
    %cst = arith.constant dense<0.000000e+00> : vector<128xf32>
    %2 = vector.multi_reduction <add>, %1, %cst [1] : vector<128x10xf32> to vector<128xf32>
    %3 = vector.shape_cast %2 : vector<128xf32> to vector<128x1xf32>
    %4 = math.sqrt %3 : vector<128x1xf32>
    %cst_1 = arith.constant 1.000000e+00 : f32
    %5 = vector.broadcast %cst_1 : f32 to vector<128x1xf32>
    %6 = arith.cmpf ogt, %4, %5 : vector<128x1xf32>
    %cst_2 = arith.constant 1.000000e-07 : f32
    %7 = vector.broadcast %cst_2 : f32 to vector<128x1xf32>
    %8 = arith.addf %4, %7 : vector<128x1xf32>
    %cst_3 = arith.constant 1.000000e+00 : f32
    %9 = vector.broadcast %cst_3 : f32 to vector<128x1xf32>
    %10 = arith.divf %9, %8 : vector<128x1xf32>
    %cst_4 = arith.constant 1.000000e+00 : f32
    %11 = vector.broadcast %cst_4 : f32 to vector<128x1xf32>
    %12 = arith.select %6, %10, %11 : vector<128x1xi1>, vector<128x1xf32>
    %13 = vector.broadcast %12 : vector<128x1xf32> to vector<128x10xf32>
    %14 = arith.mulf %0, %13 : vector<128x10xf32>
    %c0_5 = arith.constant 0 : index
    %c0_6 = arith.constant 0 : index
    %15 = vector.load %arg0[%c0_5, %c0_6] : memref<32x1xi32, #tpu.memory_space<vmem>>, vector<32x1xi32>
    %16 = tpu.iota {dimensions = array<i32: 1>} : vector<32x128xi32>
    %17 = vector.broadcast %15 : vector<32x1xi32> to vector<32x128xi32>
    %18 = arith.cmpi eq, %16, %17 : vector<32x128xi32>
    %19 = arith.extui %18 : vector<32x128xi1> to vector<32x128xi32>
    %20 = arith.sitofp %19 : vector<32x128xi32> to vector<32x128xf32>
    %cst_7 = arith.constant dense<0.000000e+00> : vector<32x10xf32>
    %21 = tpu.matmul %20, %14, %cst_7 {dimension_numbers = #tpu.dot_dimension_numbers<[1], [0], [0], [1], [0, 0, 1, 1], [], []>} : vector<32x128xf32>, vector<128x10xf32>, vector<32x10xf32> -> vector<32x10xf32>
    %c0_8 = arith.constant 0 : index
    %c0_9 = arith.constant 0 : index
    %c0_10 = arith.constant 0 : index
    %c0_11 = arith.constant 0 : index
    %22 = vector.load %arg2[%c0_8, %c0_9, %c0_10, %c0_11] : memref<2x3x10x50xf32, #tpu.memory_space<vmem>>, vector<1x1x10x50xf32>
    %23 = vector.shape_cast %22 : vector<1x1x10x50xf32> to vector<10x50xf32>
    %cst_12 = arith.constant dense<0.000000e+00> : vector<32x50xf32>
    %24 = tpu.matmul %21, %23, %cst_12 {dimension_numbers = #tpu.dot_dimension_numbers<[1], [0], [0], [1], [0, 0, 1, 1], [], []>} : vector<32x10xf32>, vector<10x50xf32>, vector<32x50xf32> -> vector<32x50xf32>
    %c0_13 = arith.constant 0 : index
    %c0_14 = arith.constant 0 : index
    %c0_15 = arith.constant 0 : index
    %c0_16 = arith.constant 0 : index
    %25 = vector.load %arg4[%c0_13, %c0_14, %c0_15, %c0_16] : memref<2x3x1x50xf32, #tpu.memory_space<vmem>>, vector<1x1x1x50xf32>
    %26 = vector.shape_cast %25 : vector<1x1x1x50xf32> to vector<1x50xf32>
    %27 = vector.broadcast %26 : vector<1x50xf32> to vector<32x50xf32>
    %28 = arith.addf %24, %27 : vector<32x50xf32>
    %c0_17 = arith.constant 0 : index
    %c1 = arith.constant 1 : index
    %c0_18 = arith.constant 0 : index
    %c0_19 = arith.constant 0 : index
    %29 = vector.load %arg2[%c0_17, %c1, %c0_18, %c0_19] : memref<2x3x10x50xf32, #tpu.memory_space<vmem>>, vector<1x1x10x50xf32>
    %30 = vector.shape_cast %29 : vector<1x1x10x50xf32> to vector<10x50xf32>
    %cst_20 = arith.constant dense<0.000000e+00> : vector<32x50xf32>
    %31 = tpu.matmul %21, %30, %cst_20 {dimension_numbers = #tpu.dot_dimension_numbers<[1], [0], [0], [1], [0, 0, 1, 1], [], []>} : vector<32x10xf32>, vector<10x50xf32>, vector<32x50xf32> -> vector<32x50xf32>
    %c0_21 = arith.constant 0 : index
    %c1_22 = arith.constant 1 : index
    %c0_23 = arith.constant 0 : index
    %c0_24 = arith.constant 0 : index
    %32 = vector.load %arg4[%c0_21, %c1_22, %c0_23, %c0_24] : memref<2x3x1x50xf32, #tpu.memory_space<vmem>>, vector<1x1x1x50xf32>
    %33 = vector.shape_cast %32 : vector<1x1x1x50xf32> to vector<1x50xf32>
    %34 = vector.broadcast %33 : vector<1x50xf32> to vector<32x50xf32>
    %35 = arith.addf %31, %34 : vector<32x50xf32>
    %c0_25 = arith.constant 0 : index
    %c2 = arith.constant 2 : index
    %c0_26 = arith.constant 0 : index
    %c0_27 = arith.constant 0 : index
    %36 = vector.load %arg2[%c0_25, %c2, %c0_26, %c0_27] : memref<2x3x10x50xf32, #tpu.memory_space<vmem>>, vector<1x1x10x50xf32>
    %37 = vector.shape_cast %36 : vector<1x1x10x50xf32> to vector<10x50xf32>
    %cst_28 = arith.constant dense<0.000000e+00> : vector<32x50xf32>
    %38 = tpu.matmul %21, %37, %cst_28 {dimension_numbers = #tpu.dot_dimension_numbers<[1], [0], [0], [1], [0, 0, 1, 1], [], []>} : vector<32x10xf32>, vector<10x50xf32>, vector<32x50xf32> -> vector<32x50xf32>
    %c0_29 = arith.constant 0 : index
    %c2_30 = arith.constant 2 : index
    %c0_31 = arith.constant 0 : index
    %c0_32 = arith.constant 0 : index
    %39 = vector.load %arg4[%c0_29, %c2_30, %c0_31, %c0_32] : memref<2x3x1x50xf32, #tpu.memory_space<vmem>>, vector<1x1x1x50xf32>
    %40 = vector.shape_cast %39 : vector<1x1x1x50xf32> to vector<1x50xf32>
    %41 = vector.broadcast %40 : vector<1x50xf32> to vector<32x50xf32>
    %42 = arith.addf %38, %41 : vector<32x50xf32>
    %c1_33 = arith.constant 1 : index
    %c0_34 = arith.constant 0 : index
    %c0_35 = arith.constant 0 : index
    %c0_36 = arith.constant 0 : index
    %43 = vector.load %arg2[%c1_33, %c0_34, %c0_35, %c0_36] : memref<2x3x10x50xf32, #tpu.memory_space<vmem>>, vector<1x1x10x50xf32>
    %44 = vector.shape_cast %43 : vector<1x1x10x50xf32> to vector<10x50xf32>
    %cst_37 = arith.constant dense<0.000000e+00> : vector<32x50xf32>
    %45 = tpu.matmul %21, %44, %cst_37 {dimension_numbers = #tpu.dot_dimension_numbers<[1], [0], [0], [1], [0, 0, 1, 1], [], []>} : vector<32x10xf32>, vector<10x50xf32>, vector<32x50xf32> -> vector<32x50xf32>
    %c1_38 = arith.constant 1 : index
    %c0_39 = arith.constant 0 : index
    %c0_40 = arith.constant 0 : index
    %c0_41 = arith.constant 0 : index
    %46 = vector.load %arg4[%c1_38, %c0_39, %c0_40, %c0_41] : memref<2x3x1x50xf32, #tpu.memory_space<vmem>>, vector<1x1x1x50xf32>
    %47 = vector.shape_cast %46 : vector<1x1x1x50xf32> to vector<1x50xf32>
    %48 = vector.broadcast %47 : vector<1x50xf32> to vector<32x50xf32>
    %49 = arith.addf %45, %48 : vector<32x50xf32>
    %c1_42 = arith.constant 1 : index
    %c1_43 = arith.constant 1 : index
    %c0_44 = arith.constant 0 : index
    %c0_45 = arith.constant 0 : index
    %50 = vector.load %arg2[%c1_42, %c1_43, %c0_44, %c0_45] : memref<2x3x10x50xf32, #tpu.memory_space<vmem>>, vector<1x1x10x50xf32>
    %51 = vector.shape_cast %50 : vector<1x1x10x50xf32> to vector<10x50xf32>
    %cst_46 = arith.constant dense<0.000000e+00> : vector<32x50xf32>
    %52 = tpu.matmul %21, %51, %cst_46 {dimension_numbers = #tpu.dot_dimension_numbers<[1], [0], [0], [1], [0, 0, 1, 1], [], []>} : vector<32x10xf32>, vector<10x50xf32>, vector<32x50xf32> -> vector<32x50xf32>
    %c1_47 = arith.constant 1 : index
    %c1_48 = arith.constant 1 : index
    %c0_49 = arith.constant 0 : index
    %c0_50 = arith.constant 0 : index
    %53 = vector.load %arg4[%c1_47, %c1_48, %c0_49, %c0_50] : memref<2x3x1x50xf32, #tpu.memory_space<vmem>>, vector<1x1x1x50xf32>
    %54 = vector.shape_cast %53 : vector<1x1x1x50xf32> to vector<1x50xf32>
    %55 = vector.broadcast %54 : vector<1x50xf32> to vector<32x50xf32>
    %56 = arith.addf %52, %55 : vector<32x50xf32>
    %c1_51 = arith.constant 1 : index
    %c2_52 = arith.constant 2 : index
    %c0_53 = arith.constant 0 : index
    %c0_54 = arith.constant 0 : index
    %57 = vector.load %arg2[%c1_51, %c2_52, %c0_53, %c0_54] : memref<2x3x10x50xf32, #tpu.memory_space<vmem>>, vector<1x1x10x50xf32>
    %58 = vector.shape_cast %57 : vector<1x1x10x50xf32> to vector<10x50xf32>
    %cst_55 = arith.constant dense<0.000000e+00> : vector<32x50xf32>
    %59 = tpu.matmul %21, %58, %cst_55 {dimension_numbers = #tpu.dot_dimension_numbers<[1], [0], [0], [1], [0, 0, 1, 1], [], []>} : vector<32x10xf32>, vector<10x50xf32>, vector<32x50xf32> -> vector<32x50xf32>
    %c1_56 = arith.constant 1 : index
    %c2_57 = arith.constant 2 : index
    %c0_58 = arith.constant 0 : index
    %c0_59 = arith.constant 0 : index
    %60 = vector.load %arg4[%c1_56, %c2_57, %c0_58, %c0_59] : memref<2x3x1x50xf32, #tpu.memory_space<vmem>>, vector<1x1x1x50xf32>
    %61 = vector.shape_cast %60 : vector<1x1x1x50xf32> to vector<1x50xf32>
    %62 = vector.broadcast %61 : vector<1x50xf32> to vector<32x50xf32>
    %63 = arith.addf %59, %62 : vector<32x50xf32>
    %c0_60 = arith.constant 0 : index
    %c0_61 = arith.constant 0 : index
    %c0_62 = arith.constant 0 : index
    %c0_63 = arith.constant 0 : index
    %64 = vector.load %arg3[%c0_60, %c0_61, %c0_62, %c0_63] : memref<2x3x50x50xf32, #tpu.memory_space<vmem>>, vector<1x1x50x50xf32>
    %65 = vector.shape_cast %64 : vector<1x1x50x50xf32> to vector<50x50xf32>
    %c0_64 = arith.constant 0 : index
    %c1_65 = arith.constant 1 : index
    %c0_66 = arith.constant 0 : index
    %c0_67 = arith.constant 0 : index
    %66 = vector.load %arg3[%c0_64, %c1_65, %c0_66, %c0_67] : memref<2x3x50x50xf32, #tpu.memory_space<vmem>>, vector<1x1x50x50xf32>
    %67 = vector.shape_cast %66 : vector<1x1x50x50xf32> to vector<50x50xf32>
    %c0_68 = arith.constant 0 : index
    %c2_69 = arith.constant 2 : index
    %c0_70 = arith.constant 0 : index
    %c0_71 = arith.constant 0 : index
    %68 = vector.load %arg3[%c0_68, %c2_69, %c0_70, %c0_71] : memref<2x3x50x50xf32, #tpu.memory_space<vmem>>, vector<1x1x50x50xf32>
    %69 = vector.shape_cast %68 : vector<1x1x50x50xf32> to vector<50x50xf32>
    %c1_72 = arith.constant 1 : index
    %c0_73 = arith.constant 0 : index
    %c0_74 = arith.constant 0 : index
    %c0_75 = arith.constant 0 : index
    %70 = vector.load %arg3[%c1_72, %c0_73, %c0_74, %c0_75] : memref<2x3x50x50xf32, #tpu.memory_space<vmem>>, vector<1x1x50x50xf32>
    %71 = vector.shape_cast %70 : vector<1x1x50x50xf32> to vector<50x50xf32>
    %c1_76 = arith.constant 1 : index
    %c1_77 = arith.constant 1 : index
    %c0_78 = arith.constant 0 : index
    %c0_79 = arith.constant 0 : index
    %72 = vector.load %arg3[%c1_76, %c1_77, %c0_78, %c0_79] : memref<2x3x50x50xf32, #tpu.memory_space<vmem>>, vector<1x1x50x50xf32>
    %73 = vector.shape_cast %72 : vector<1x1x50x50xf32> to vector<50x50xf32>
    %c1_80 = arith.constant 1 : index
    %c2_81 = arith.constant 2 : index
    %c0_82 = arith.constant 0 : index
    %c0_83 = arith.constant 0 : index
    %74 = vector.load %arg3[%c1_80, %c2_81, %c0_82, %c0_83] : memref<2x3x50x50xf32, #tpu.memory_space<vmem>>, vector<1x1x50x50xf32>
    %75 = vector.shape_cast %74 : vector<1x1x50x50xf32> to vector<50x50xf32>
    %c0_84 = arith.constant 0 : index
    %c0_85 = arith.constant 0 : index
    %c0_86 = arith.constant 0 : index
    %c0_87 = arith.constant 0 : index
    %76 = vector.load %arg5[%c0_84, %c0_85, %c0_86, %c0_87] : memref<2x3x1x50xf32, #tpu.memory_space<vmem>>, vector<1x1x1x50xf32>
    %77 = vector.shape_cast %76 : vector<1x1x1x50xf32> to vector<1x50xf32>
    %c0_88 = arith.constant 0 : index
    %c1_89 = arith.constant 1 : index
    %c0_90 = arith.constant 0 : index
    %c0_91 = arith.constant 0 : index
    %78 = vector.load %arg5[%c0_88, %c1_89, %c0_90, %c0_91] : memref<2x3x1x50xf32, #tpu.memory_space<vmem>>, vector<1x1x1x50xf32>
    %79 = vector.shape_cast %78 : vector<1x1x1x50xf32> to vector<1x50xf32>
    %c0_92 = arith.constant 0 : index
    %c2_93 = arith.constant 2 : index
    %c0_94 = arith.constant 0 : index
    %c0_95 = arith.constant 0 : index
    %80 = vector.load %arg5[%c0_92, %c2_93, %c0_94, %c0_95] : memref<2x3x1x50xf32, #tpu.memory_space<vmem>>, vector<1x1x1x50xf32>
    %81 = vector.shape_cast %80 : vector<1x1x1x50xf32> to vector<1x50xf32>
    %c1_96 = arith.constant 1 : index
    %c0_97 = arith.constant 0 : index
    %c0_98 = arith.constant 0 : index
    %c0_99 = arith.constant 0 : index
    %82 = vector.load %arg5[%c1_96, %c0_97, %c0_98, %c0_99] : memref<2x3x1x50xf32, #tpu.memory_space<vmem>>, vector<1x1x1x50xf32>
    %83 = vector.shape_cast %82 : vector<1x1x1x50xf32> to vector<1x50xf32>
    %c1_100 = arith.constant 1 : index
    %c1_101 = arith.constant 1 : index
    %c0_102 = arith.constant 0 : index
    %c0_103 = arith.constant 0 : index
    %84 = vector.load %arg5[%c1_100, %c1_101, %c0_102, %c0_103] : memref<2x3x1x50xf32, #tpu.memory_space<vmem>>, vector<1x1x1x50xf32>
    %85 = vector.shape_cast %84 : vector<1x1x1x50xf32> to vector<1x50xf32>
    %c1_104 = arith.constant 1 : index
    %c2_105 = arith.constant 2 : index
    %c0_106 = arith.constant 0 : index
    %c0_107 = arith.constant 0 : index
    %86 = vector.load %arg5[%c1_104, %c2_105, %c0_106, %c0_107] : memref<2x3x1x50xf32, #tpu.memory_space<vmem>>, vector<1x1x1x50xf32>
    %87 = vector.shape_cast %86 : vector<1x1x1x50xf32> to vector<1x50xf32>
    %cst_108 = arith.constant 0.000000e+00 : f32
    %88 = vector.broadcast %cst_108 : f32 to vector<16x50xf32>
    %cst_109 = arith.constant 0.000000e+00 : f32
    %89 = vector.broadcast %cst_109 : f32 to vector<16x50xf32>
    %cst_110 = arith.constant dense<0.000000e+00> : vector<16x50xf32>
    %90 = tpu.matmul %88, %65, %cst_110 {dimension_numbers = #tpu.dot_dimension_numbers<[1], [0], [0], [1], [0, 0, 1, 1], [], []>} : vector<16x50xf32>, vector<50x50xf32>, vector<16x50xf32> -> vector<16x50xf32>
    %91 = vector.broadcast %77 : vector<1x50xf32> to vector<16x50xf32>
    %92 = arith.addf %90, %91 : vector<16x50xf32>
    %cst_111 = arith.constant dense<0.000000e+00> : vector<16x50xf32>
    %93 = tpu.matmul %88, %67, %cst_111 {dimension_numbers = #tpu.dot_dimension_numbers<[1], [0], [0], [1], [0, 0, 1, 1], [], []>} : vector<16x50xf32>, vector<50x50xf32>, vector<16x50xf32> -> vector<16x50xf32>
    %94 = vector.broadcast %79 : vector<1x50xf32> to vector<16x50xf32>
    %95 = arith.addf %93, %94 : vector<16x50xf32>
    %cst_112 = arith.constant dense<0.000000e+00> : vector<16x50xf32>
    %96 = tpu.matmul %88, %69, %cst_112 {dimension_numbers = #tpu.dot_dimension_numbers<[1], [0], [0], [1], [0, 0, 1, 1], [], []>} : vector<16x50xf32>, vector<50x50xf32>, vector<16x50xf32> -> vector<16x50xf32>
    %97 = vector.broadcast %81 : vector<1x50xf32> to vector<16x50xf32>
    %98 = arith.addf %96, %97 : vector<16x50xf32>
    %99 = vector.extract_strided_slice %28 {offsets = [0, 0], sizes = [16, 50], strides = [1, 1]} : vector<32x50xf32> to vector<16x50xf32>
    %100 = arith.addf %99, %92 : vector<16x50xf32>
    %101 = arith.negf %100 : vector<16x50xf32>
    %102 = math.exp %101 : vector<16x50xf32>
    %cst_113 = arith.constant 1.000000e+00 : f32
    %103 = vector.broadcast %cst_113 : f32 to vector<16x50xf32>
    %104 = arith.addf %103, %102 : vector<16x50xf32>
    %105 = arith.divf %103, %104 : vector<16x50xf32>
    %106 = vector.extract_strided_slice %35 {offsets = [0, 0], sizes = [16, 50], strides = [1, 1]} : vector<32x50xf32> to vector<16x50xf32>
    %107 = arith.addf %106, %95 : vector<16x50xf32>
    %108 = arith.negf %107 : vector<16x50xf32>
    %109 = math.exp %108 : vector<16x50xf32>
    %cst_114 = arith.constant 1.000000e+00 : f32
    %110 = vector.broadcast %cst_114 : f32 to vector<16x50xf32>
    %111 = arith.addf %110, %109 : vector<16x50xf32>
    %112 = arith.divf %110, %111 : vector<16x50xf32>
    %113 = vector.extract_strided_slice %42 {offsets = [0, 0], sizes = [16, 50], strides = [1, 1]} : vector<32x50xf32> to vector<16x50xf32>
    %114 = arith.mulf %105, %98 : vector<16x50xf32>
    %115 = arith.addf %113, %114 : vector<16x50xf32>
    %116 = math.tanh %115 : vector<16x50xf32>
    %cst_115 = arith.constant 1.000000e+00 : f32
    %117 = vector.broadcast %cst_115 : f32 to vector<16x50xf32>
    %118 = arith.subf %117, %112 : vector<16x50xf32>
    %119 = arith.mulf %118, %116 : vector<16x50xf32>
    %120 = arith.mulf %112, %88 : vector<16x50xf32>
    %121 = arith.addf %119, %120 : vector<16x50xf32>
    %cst_116 = arith.constant dense<0.000000e+00> : vector<16x50xf32>
    %122 = tpu.matmul %89, %71, %cst_116 {dimension_numbers = #tpu.dot_dimension_numbers<[1], [0], [0], [1], [0, 0, 1, 1], [], []>} : vector<16x50xf32>, vector<50x50xf32>, vector<16x50xf32> -> vector<16x50xf32>
    %123 = vector.broadcast %83 : vector<1x50xf32> to vector<16x50xf32>
    %124 = arith.addf %122, %123 : vector<16x50xf32>
    %cst_117 = arith.constant dense<0.000000e+00> : vector<16x50xf32>
    %125 = tpu.matmul %89, %73, %cst_117 {dimension_numbers = #tpu.dot_dimension_numbers<[1], [0], [0], [1], [0, 0, 1, 1], [], []>} : vector<16x50xf32>, vector<50x50xf32>, vector<16x50xf32> -> vector<16x50xf32>
    %126 = vector.broadcast %85 : vector<1x50xf32> to vector<16x50xf32>
    %127 = arith.addf %125, %126 : vector<16x50xf32>
    %cst_118 = arith.constant dense<0.000000e+00> : vector<16x50xf32>
    %128 = tpu.matmul %89, %75, %cst_118 {dimension_numbers = #tpu.dot_dimension_numbers<[1], [0], [0], [1], [0, 0, 1, 1], [], []>} : vector<16x50xf32>, vector<50x50xf32>, vector<16x50xf32> -> vector<16x50xf32>
    %129 = vector.broadcast %87 : vector<1x50xf32> to vector<16x50xf32>
    %130 = arith.addf %128, %129 : vector<16x50xf32>
    %131 = vector.extract_strided_slice %49 {offsets = [16, 0], sizes = [16, 50], strides = [1, 1]} : vector<32x50xf32> to vector<16x50xf32>
    %132 = arith.addf %131, %124 : vector<16x50xf32>
    %133 = arith.negf %132 : vector<16x50xf32>
    %134 = math.exp %133 : vector<16x50xf32>
    %cst_119 = arith.constant 1.000000e+00 : f32
    %135 = vector.broadcast %cst_119 : f32 to vector<16x50xf32>
    %136 = arith.addf %135, %134 : vector<16x50xf32>
    %137 = arith.divf %135, %136 : vector<16x50xf32>
    %138 = vector.extract_strided_slice %56 {offsets = [16, 0], sizes = [16, 50], strides = [1, 1]} : vector<32x50xf32> to vector<16x50xf32>
    %139 = arith.addf %138, %127 : vector<16x50xf32>
    %140 = arith.negf %139 : vector<16x50xf32>
    %141 = math.exp %140 : vector<16x50xf32>
    %cst_120 = arith.constant 1.000000e+00 : f32
    %142 = vector.broadcast %cst_120 : f32 to vector<16x50xf32>
    %143 = arith.addf %142, %141 : vector<16x50xf32>
    %144 = arith.divf %142, %143 : vector<16x50xf32>
    %145 = vector.extract_strided_slice %63 {offsets = [16, 0], sizes = [16, 50], strides = [1, 1]} : vector<32x50xf32> to vector<16x50xf32>
    %146 = arith.mulf %137, %130 : vector<16x50xf32>
    %147 = arith.addf %145, %146 : vector<16x50xf32>
    %148 = math.tanh %147 : vector<16x50xf32>
    %cst_121 = arith.constant 1.000000e+00 : f32
    %149 = vector.broadcast %cst_121 : f32 to vector<16x50xf32>
    %150 = arith.subf %149, %144 : vector<16x50xf32>
    %151 = arith.mulf %150, %148 : vector<16x50xf32>
    %152 = arith.mulf %144, %89 : vector<16x50xf32>
    %153 = arith.addf %151, %152 : vector<16x50xf32>
    %cst_122 = arith.constant dense<0.000000e+00> : vector<16x50xf32>
    %154 = tpu.matmul %121, %65, %cst_122 {dimension_numbers = #tpu.dot_dimension_numbers<[1], [0], [0], [1], [0, 0, 1, 1], [], []>} : vector<16x50xf32>, vector<50x50xf32>, vector<16x50xf32> -> vector<16x50xf32>
    %155 = vector.broadcast %77 : vector<1x50xf32> to vector<16x50xf32>
    %156 = arith.addf %154, %155 : vector<16x50xf32>
    %cst_123 = arith.constant dense<0.000000e+00> : vector<16x50xf32>
    %157 = tpu.matmul %121, %67, %cst_123 {dimension_numbers = #tpu.dot_dimension_numbers<[1], [0], [0], [1], [0, 0, 1, 1], [], []>} : vector<16x50xf32>, vector<50x50xf32>, vector<16x50xf32> -> vector<16x50xf32>
    %158 = vector.broadcast %79 : vector<1x50xf32> to vector<16x50xf32>
    %159 = arith.addf %157, %158 : vector<16x50xf32>
    %cst_124 = arith.constant dense<0.000000e+00> : vector<16x50xf32>
    %160 = tpu.matmul %121, %69, %cst_124 {dimension_numbers = #tpu.dot_dimension_numbers<[1], [0], [0], [1], [0, 0, 1, 1], [], []>} : vector<16x50xf32>, vector<50x50xf32>, vector<16x50xf32> -> vector<16x50xf32>
    %161 = vector.broadcast %81 : vector<1x50xf32> to vector<16x50xf32>
    %162 = arith.addf %160, %161 : vector<16x50xf32>
    %163 = vector.extract_strided_slice %28 {offsets = [16, 0], sizes = [16, 50], strides = [1, 1]} : vector<32x50xf32> to vector<16x50xf32>
    %164 = arith.addf %163, %156 : vector<16x50xf32>
    %165 = arith.negf %164 : vector<16x50xf32>
    %166 = math.exp %165 : vector<16x50xf32>
    %cst_125 = arith.constant 1.000000e+00 : f32
    %167 = vector.broadcast %cst_125 : f32 to vector<16x50xf32>
    %168 = arith.addf %167, %166 : vector<16x50xf32>
    %169 = arith.divf %167, %168 : vector<16x50xf32>
    %170 = vector.extract_strided_slice %35 {offsets = [16, 0], sizes = [16, 50], strides = [1, 1]} : vector<32x50xf32> to vector<16x50xf32>
    %171 = arith.addf %170, %159 : vector<16x50xf32>
    %172 = arith.negf %171 : vector<16x50xf32>
    %173 = math.exp %172 : vector<16x50xf32>
    %cst_126 = arith.constant 1.000000e+00 : f32
    %174 = vector.broadcast %cst_126 : f32 to vector<16x50xf32>
    %175 = arith.addf %174, %173 : vector<16x50xf32>
    %176 = arith.divf %174, %175 : vector<16x50xf32>
    %177 = vector.extract_strided_slice %42 {offsets = [16, 0], sizes = [16, 50], strides = [1, 1]} : vector<32x50xf32> to vector<16x50xf32>
    %178 = arith.mulf %169, %162 : vector<16x50xf32>
    %179 = arith.addf %177, %178 : vector<16x50xf32>
    %180 = math.tanh %179 : vector<16x50xf32>
    %cst_127 = arith.constant 1.000000e+00 : f32
    %181 = vector.broadcast %cst_127 : f32 to vector<16x50xf32>
    %182 = arith.subf %181, %176 : vector<16x50xf32>
    %183 = arith.mulf %182, %180 : vector<16x50xf32>
    %184 = arith.mulf %176, %121 : vector<16x50xf32>
    %185 = arith.addf %183, %184 : vector<16x50xf32>
    %cst_128 = arith.constant dense<0.000000e+00> : vector<16x50xf32>
    %186 = tpu.matmul %153, %71, %cst_128 {dimension_numbers = #tpu.dot_dimension_numbers<[1], [0], [0], [1], [0, 0, 1, 1], [], []>} : vector<16x50xf32>, vector<50x50xf32>, vector<16x50xf32> -> vector<16x50xf32>
    %187 = vector.broadcast %83 : vector<1x50xf32> to vector<16x50xf32>
    %188 = arith.addf %186, %187 : vector<16x50xf32>
    %cst_129 = arith.constant dense<0.000000e+00> : vector<16x50xf32>
    %189 = tpu.matmul %153, %73, %cst_129 {dimension_numbers = #tpu.dot_dimension_numbers<[1], [0], [0], [1], [0, 0, 1, 1], [], []>} : vector<16x50xf32>, vector<50x50xf32>, vector<16x50xf32> -> vector<16x50xf32>
    %190 = vector.broadcast %85 : vector<1x50xf32> to vector<16x50xf32>
    %191 = arith.addf %189, %190 : vector<16x50xf32>
    %cst_130 = arith.constant dense<0.000000e+00> : vector<16x50xf32>
    %192 = tpu.matmul %153, %75, %cst_130 {dimension_numbers = #tpu.dot_dimension_numbers<[1], [0], [0], [1], [0, 0, 1, 1], [], []>} : vector<16x50xf32>, vector<50x50xf32>, vector<16x50xf32> -> vector<16x50xf32>
    %193 = vector.broadcast %87 : vector<1x50xf32> to vector<16x50xf32>
    %194 = arith.addf %192, %193 : vector<16x50xf32>
    %195 = vector.extract_strided_slice %49 {offsets = [0, 0], sizes = [16, 50], strides = [1, 1]} : vector<32x50xf32> to vector<16x50xf32>
    %196 = arith.addf %195, %188 : vector<16x50xf32>
    %197 = arith.negf %196 : vector<16x50xf32>
    %198 = math.exp %197 : vector<16x50xf32>
    %cst_131 = arith.constant 1.000000e+00 : f32
    %199 = vector.broadcast %cst_131 : f32 to vector<16x50xf32>
    %200 = arith.addf %199, %198 : vector<16x50xf32>
    %201 = arith.divf %199, %200 : vector<16x50xf32>
    %202 = vector.extract_strided_slice %56 {offsets = [0, 0], sizes = [16, 50], strides = [1, 1]} : vector<32x50xf32> to vector<16x50xf32>
    %203 = arith.addf %202, %191 : vector<16x50xf32>
    %204 = arith.negf %203 : vector<16x50xf32>
    %205 = math.exp %204 : vector<16x50xf32>
    %cst_132 = arith.constant 1.000000e+00 : f32
    %206 = vector.broadcast %cst_132 : f32 to vector<16x50xf32>
    %207 = arith.addf %206, %205 : vector<16x50xf32>
    %208 = arith.divf %206, %207 : vector<16x50xf32>
    %209 = vector.extract_strided_slice %63 {offsets = [0, 0], sizes = [16, 50], strides = [1, 1]} : vector<32x50xf32> to vector<16x50xf32>
    %210 = arith.mulf %201, %194 : vector<16x50xf32>
    %211 = arith.addf %209, %210 : vector<16x50xf32>
    %212 = math.tanh %211 : vector<16x50xf32>
    %cst_133 = arith.constant 1.000000e+00 : f32
    %213 = vector.broadcast %cst_133 : f32 to vector<16x50xf32>
    %214 = arith.subf %213, %208 : vector<16x50xf32>
    %215 = arith.mulf %214, %212 : vector<16x50xf32>
    %216 = arith.mulf %208, %153 : vector<16x50xf32>
    %217 = arith.addf %215, %216 : vector<16x50xf32>
    %c0_134 = arith.constant 0 : index
    %c0_135 = arith.constant 0 : index
    %c0_136 = arith.constant 0 : index
    %218 = vector.load %arg6[%c0_134, %c0_135, %c0_136] : memref<2x50x2xf32, #tpu.memory_space<vmem>>, vector<1x50x2xf32>
    %219 = vector.shape_cast %218 : vector<1x50x2xf32> to vector<50x2xf32>
    %cst_137 = arith.constant dense<0.000000e+00> : vector<16x2xf32>
    %220 = tpu.matmul %217, %219, %cst_137 {dimension_numbers = #tpu.dot_dimension_numbers<[1], [0], [0], [1], [0, 0, 1, 1], [], []>} : vector<16x50xf32>, vector<50x2xf32>, vector<16x2xf32> -> vector<16x2xf32>
    %c1_138 = arith.constant 1 : index
    %c0_139 = arith.constant 0 : index
    %c0_140 = arith.constant 0 : index
    %221 = vector.load %arg6[%c1_138, %c0_139, %c0_140] : memref<2x50x2xf32, #tpu.memory_space<vmem>>, vector<1x50x2xf32>
    %222 = vector.shape_cast %221 : vector<1x50x2xf32> to vector<50x2xf32>
    %cst_141 = arith.constant dense<0.000000e+00> : vector<16x2xf32>
    %223 = tpu.matmul %185, %222, %cst_141 {dimension_numbers = #tpu.dot_dimension_numbers<[1], [0], [0], [1], [0, 0, 1, 1], [], []>} : vector<16x50xf32>, vector<50x2xf32>, vector<16x2xf32> -> vector<16x2xf32>
    %224 = arith.addf %220, %223 : vector<16x2xf32>
    %c0_142 = arith.constant 0 : index
    %c0_143 = arith.constant 0 : index
    %225 = vector.load %arg7[%c0_142, %c0_143] : memref<1x2xf32, #tpu.memory_space<vmem>>, vector<1x2xf32>
    %226 = vector.broadcast %225 : vector<1x2xf32> to vector<16x2xf32>
    %227 = arith.addf %224, %226 : vector<16x2xf32>
    %c0_144 = arith.constant 0 : index
    %c0_145 = arith.constant 0 : index
    %228 = vector.load %arg8[%c0_144, %c0_145] : memref<16x2xf32, #tpu.memory_space<vmem>>, vector<16x2xf32>
    tpu.vector_store %arg8[%c0_144, %c0_145], %227 {strides = array<i32>} : memref<16x2xf32, #tpu.memory_space<vmem>>, vector<16x2xf32>,
    return
  }
}

</mosaic_0001>

<llo_original>
// kernel: rnn_attn_forward.1
$region0: #{rnn_attn_forward.1}
  #allocation0 [shape = 'u32[]', space=smem, size = 0x4, offset = 0x4, fixed_abs, tag = 'smem constant byte address 0x4 - core index']
  #allocation1 [shape = 'u32[144,128]{1,0:T(1,128)}', space=vmem, size = 0x12000, scoped, tag = 'internal scratch']
  %s0 = inlined_call_operand.vmem [shape: s32[32,1], index: 0, kind: input, shape index: {}]
  %s1 = inlined_call_operand.vmem [shape: f32[128,10], index: 1, kind: input, shape index: {}]
  %s2 = inlined_call_operand.vmem [shape: f32[2,3,10,50], index: 2, kind: input, shape index: {}]
  %s3 = inlined_call_operand.vmem [shape: f32[2,3,50,50], index: 3, kind: input, shape index: {}]
  %s4 = inlined_call_operand.vmem [shape: f32[2,3,1,50], index: 4, kind: input, shape index: {}]
  %s5 = inlined_call_operand.vmem [shape: f32[2,3,1,50], index: 5, kind: input, shape index: {}]
  %s6 = inlined_call_operand.vmem [shape: f32[2,50,2], index: 6, kind: input, shape index: {}]
  %s7 = inlined_call_operand.vmem [shape: f32[1,2], index: 7, kind: input, shape index: {}]
  %s8 = inlined_call_operand.vmem [shape: f32[16,2], index: 8, kind: output, shape index: {}]
  %s9 = sld [smem:[#allocation0]]
  $region42: #{rnn_attn_forward.1} parent=0
    _
  %s11 = ssub.s32 1, %s9
  %s12 = scalar_select 0, %s11, %s9
  // Predicated region
  $region2: #{rnn_attn_forward.1} parent=0 // pred_check
    _
  $region3: #{rnn_attn_forward.1} parent=0 // pred_check_branch
    %14 = sbr.rel (0) target = $region5
  $region4: #{rnn_attn_forward.1} parent=0 // pred_region
    _
  $region5: #{rnn_attn_forward.1} parent=0 // pred_fallthru
    _
  // Predicated region
  $region6: #{rnn_attn_forward.1} parent=0 // pred_check
    _
  $region7: #{rnn_attn_forward.1} parent=0 // pred_check_branch
    %16 = sbr.rel (0) target = $region9
  $region8: #{rnn_attn_forward.1} parent=0 // pred_region
    _
  $region9: #{rnn_attn_forward.1} parent=0 // pred_fallthru
    _
  // Predicated region
  $region10: #{rnn_attn_forward.1} parent=0 // pred_check
    _
  $region11: #{rnn_attn_forward.1} parent=0 // pred_check_branch
    %18 = sbr.rel (0) target = $region13
  $region12: #{rnn_attn_forward.1} parent=0 // pred_region
    _
  $region13: #{rnn_attn_forward.1} parent=0 // pred_fallthru
    _
  // Predicated region
  $region14: #{rnn_attn_forward.1} parent=0 // pred_check
    _
  $region15: #{rnn_attn_forward.1} parent=0 // pred_check_branch
    %20 = sbr.rel (0) target = $region17
  $region16: #{rnn_attn_forward.1} parent=0 // pred_region
    _
  $region17: #{rnn_attn_forward.1} parent=0 // pred_fallthru
    _
  // Predicated region
  $region18: #{rnn_attn_forward.1} parent=0 // pred_check
    _
  $region19: #{rnn_attn_forward.1} parent=0 // pred_check_branch
    %22 = sbr.rel (0) target = $region21
  $region20: #{rnn_attn_forward.1} parent=0 // pred_region
    _
  $region21: #{rnn_attn_forward.1} parent=0 // pred_fallthru
    _
  // Predicated region
  $region22: #{rnn_attn_forward.1} parent=0 // pred_check
    _
  $region23: #{rnn_attn_forward.1} parent=0 // pred_check_branch
    %24 = sbr.rel (0) target = $region25
  $region24: #{rnn_attn_forward.1} parent=0 // pred_region
    _
  $region25: #{rnn_attn_forward.1} parent=0 // pred_fallthru
    _
  // Predicated region
  $region26: #{rnn_attn_forward.1} parent=0 // pred_check
    _
  $region27: #{rnn_attn_forward.1} parent=0 // pred_check_branch
    %26 = sbr.rel (0) target = $region29
  $region28: #{rnn_attn_forward.1} parent=0 // pred_region
    _
  $region29: #{rnn_attn_forward.1} parent=0 // pred_fallthru
    _
  // Predicated region
  $region30: #{rnn_attn_forward.1} parent=0 // pred_check
    _
  $region31: #{rnn_attn_forward.1} parent=0 // pred_check_branch
    %28 = sbr.rel (0) target = $region33
  $region32: #{rnn_attn_forward.1} parent=0 // pred_region
    _
  $region33: #{rnn_attn_forward.1} parent=0 // pred_fallthru
    _
  %v29 = vld [vmem:[%s1] sm:$0xff]
  %v30 = vld [vmem:[%s1 + $0x8] sm:$0xff]
  %v31 = vld [vmem:[%s1 + $0x10] sm:$0xff]
  %v32 = vld [vmem:[%s1 + $0x18] sm:$0xff]
  %v33 = vld [vmem:[%s1 + $0x20] sm:$0xff]
  %v34 = vld [vmem:[%s1 + $0x28] sm:$0xff]
  %v35 = vld [vmem:[%s1 + $0x30] sm:$0xff]
  %v36 = vld [vmem:[%s1 + $0x38] sm:$0xff]
  %v37 = vld [vmem:[%s1 + $0x40] sm:$0xff]
  %v38 = vld [vmem:[%s1 + $0x48] sm:$0xff]
  %v39 = vld [vmem:[%s1 + $0x50] sm:$0xff]
  %v40 = vld [vmem:[%s1 + $0x58] sm:$0xff]
  %v41 = vld [vmem:[%s1 + $0x60] sm:$0xff]
  %v42 = vld [vmem:[%s1 + $0x68] sm:$0xff]
  %v43 = vld [vmem:[%s1 + $0x70] sm:$0xff]
  %v44 = vld [vmem:[%s1 + $0x78] sm:$0xff]
  %v45 = vmul.f32 %v29, %v29
  %v46 = vmul.f32 %v30, %v30
  %v47 = vmul.f32 %v31, %v31
  %v48 = vmul.f32 %v32, %v32
  %v49 = vmul.f32 %v33, %v33
  %v50 = vmul.f32 %v34, %v34
  %v51 = vmul.f32 %v35, %v35
  %v52 = vmul.f32 %v36, %v36
  %v53 = vmul.f32 %v37, %v37
  %v54 = vmul.f32 %v38, %v38
  %v55 = vmul.f32 %v39, %v39
  %v56 = vmul.f32 %v40, %v40
  %v57 = vmul.f32 %v41, %v41
  %v58 = vmul.f32 %v42, %v42
  %v59 = vmul.f32 %v43, %v43
  %v60 = vmul.f32 %v44, %v44
  %vm61 = vcmask 80896
  %v62 = vsel %vm61, %v45, 0.0
  %63 = vadd.xlane.f32.xlu0 %v62
  %v64 = vpop.xlane.xlu0 %63
  %v65 = vsel %vm61, %v46, 0.0
  %66 = vadd.xlane.f32.xlu0 %v65
  %v67 = vpop.xlane.xlu0 %66
  %v68 = vsel %vm61, %v47, 0.0
  %69 = vadd.xlane.f32.xlu0 %v68
  %v70 = vpop.xlane.xlu0 %69
  %v71 = vsel %vm61, %v48, 0.0
  %72 = vadd.xlane.f32.xlu0 %v71
  %v73 = vpop.xlane.xlu0 %72
  %v74 = vsel %vm61, %v49, 0.0
  %75 = vadd.xlane.f32.xlu0 %v74
  %v76 = vpop.xlane.xlu0 %75
  %v77 = vsel %vm61, %v50, 0.0
  %78 = vadd.xlane.f32.xlu0 %v77
  %v79 = vpop.xlane.xlu0 %78
  %v80 = vsel %vm61, %v51, 0.0
  %81 = vadd.xlane.f32.xlu0 %v80
  %v82 = vpop.xlane.xlu0 %81
  %v83 = vsel %vm61, %v52, 0.0
  %84 = vadd.xlane.f32.xlu0 %v83
  %v85 = vpop.xlane.xlu0 %84
  %v86 = vsel %vm61, %v53, 0.0
  %87 = vadd.xlane.f32.xlu0 %v86
  %v88 = vpop.xlane.xlu0 %87
  %v89 = vsel %vm61, %v54, 0.0
  %90 = vadd.xlane.f32.xlu0 %v89
  %v91 = vpop.xlane.xlu0 %90
  %v92 = vsel %vm61, %v55, 0.0
  %93 = vadd.xlane.f32.xlu0 %v92
  %v94 = vpop.xlane.xlu0 %93
  %v95 = vsel %vm61, %v56, 0.0
  %96 = vadd.xlane.f32.xlu0 %v95
  %v97 = vpop.xlane.xlu0 %96
  %v98 = vsel %vm61, %v57, 0.0
  %99 = vadd.xlane.f32.xlu0 %v98
  %v100 = vpop.xlane.xlu0 %99
  %v101 = vsel %vm61, %v58, 0.0
  %102 = vadd.xlane.f32.xlu0 %v101
  %v103 = vpop.xlane.xlu0 %102
  %v104 = vsel %vm61, %v59, 0.0
  %105 = vadd.xlane.f32.xlu0 %v104
  %v106 = vpop.xlane.xlu0 %105
  %v107 = vsel %vm61, %v60, 0.0
  %108 = vadd.xlane.f32.xlu0 %v107
  %v109 = vpop.xlane.xlu0 %108
  %v110 = vrsqrt.pop %v64
  %v111 = vmul.f32 %v64, %v110
  %vm112 = vcmp.eq.f32.partialorder %v64, inf
  %v113 = vsel %vm112, %v64, %v111
  %vm114 = vcmp.eq.f32.partialorder %v64, 0.0
  %v115 = vand.u32 %v64, 2147483648
  %v116 = vsel %vm114, %v115, %v113
  %v117 = vrsqrt.pop %v67
  %v118 = vmul.f32 %v67, %v117
  %vm119 = vcmp.eq.f32.partialorder %v67, inf
  %v120 = vsel %vm119, %v67, %v118
  %vm121 = vcmp.eq.f32.partialorder %v67, 0.0
  %v122 = vand.u32 %v67, 2147483648
  %v123 = vsel %vm121, %v122, %v120
  %v124 = vrsqrt.pop %v70
  %v125 = vmul.f32 %v70, %v124
  %vm126 = vcmp.eq.f32.partialorder %v70, inf
  %v127 = vsel %vm126, %v70, %v125
  %vm128 = vcmp.eq.f32.partialorder %v70, 0.0
  %v129 = vand.u32 %v70, 2147483648
  %v130 = vsel %vm128, %v129, %v127
  %v131 = vrsqrt.pop %v73
  %v132 = vmul.f32 %v73, %v131
  %vm133 = vcmp.eq.f32.partialorder %v73, inf
  %v134 = vsel %vm133, %v73, %v132
  %vm135 = vcmp.eq.f32.partialorder %v73, 0.0
  %v136 = vand.u32 %v73, 2147483648
  %v137 = vsel %vm135, %v136, %v134
  %v138 = vrsqrt.pop %v76
  %v139 = vmul.f32 %v76, %v138
  %vm140 = vcmp.eq.f32.partialorder %v76, inf
  %v141 = vsel %vm140, %v76, %v139
  %vm142 = vcmp.eq.f32.partialorder %v76, 0.0
  %v143 = vand.u32 %v76, 2147483648
  %v144 = vsel %vm142, %v143, %v141
  %v145 = vrsqrt.pop %v79
  %v146 = vmul.f32 %v79, %v145
  %vm147 = vcmp.eq.f32.partialorder %v79, inf
  %v148 = vsel %vm147, %v79, %v146
  %vm149 = vcmp.eq.f32.partialorder %v79, 0.0
  %v150 = vand.u32 %v79, 2147483648
  %v151 = vsel %vm149, %v150, %v148
  %v152 = vrsqrt.pop %v82
  %v153 = vmul.f32 %v82, %v152
  %vm154 = vcmp.eq.f32.partialorder %v82, inf
  %v155 = vsel %vm154, %v82, %v153
  %vm156 = vcmp.eq.f32.partialorder %v82, 0.0
  %v157 = vand.u32 %v82, 2147483648
  %v158 = vsel %vm156, %v157, %v155
  %v159 = vrsqrt.pop %v85
  %v160 = vmul.f32 %v85, %v159
  %vm161 = vcmp.eq.f32.partialorder %v85, inf
  %v162 = vsel %vm161, %v85, %v160
  %vm163 = vcmp.eq.f32.partialorder %v85, 0.0
  %v164 = vand.u32 %v85, 2147483648
  %v165 = vsel %vm163, %v164, %v162
  %v166 = vrsqrt.pop %v88
  %v167 = vmul.f32 %v88, %v166
  %vm168 = vcmp.eq.f32.partialorder %v88, inf
  %v169 = vsel %vm168, %v88, %v167
  %vm170 = vcmp.eq.f32.partialorder %v88, 0.0
  %v171 = vand.u32 %v88, 2147483648
  %v172 = vsel %vm170, %v171, %v169
  %v173 = vrsqrt.pop %v91
  %v174 = vmul.f32 %v91, %v173
  %vm175 = vcmp.eq.f32.partialorder %v91, inf
  %v176 = vsel %vm175, %v91, %v174
  %vm177 = vcmp.eq.f32.partialorder %v91, 0.0
  %v178 = vand.u32 %v91, 2147483648
  %v179 = vsel %vm177, %v178, %v176
  %v180 = vrsqrt.pop %v94
  %v181 = vmul.f32 %v94, %v180
  %vm182 = vcmp.eq.f32.partialorder %v94, inf
  %v183 = vsel %vm182, %v94, %v181
  %vm184 = vcmp.eq.f32.partialorder %v94, 0.0
  %v185 = vand.u32 %v94, 2147483648
  %v186 = vsel %vm184, %v185, %v183
  %v187 = vrsqrt.pop %v97
  %v188 = vmul.f32 %v97, %v187
  %vm189 = vcmp.eq.f32.partialorder %v97, inf
  %v190 = vsel %vm189, %v97, %v188
  %vm191 = vcmp.eq.f32.partialorder %v97, 0.0
  %v192 = vand.u32 %v97, 2147483648
  %v193 = vsel %vm191, %v192, %v190
  %v194 = vrsqrt.pop %v100
  %v195 = vmul.f32 %v100, %v194
  %vm196 = vcmp.eq.f32.partialorder %v100, inf
  %v197 = vsel %vm196, %v100, %v195
  %vm198 = vcmp.eq.f32.partialorder %v100, 0.0
  %v199 = vand.u32 %v100, 2147483648
  %v200 = vsel %vm198, %v199, %v197
  %v201 = vrsqrt.pop %v103
  %v202 = vmul.f32 %v103, %v201
  %vm203 = vcmp.eq.f32.partialorder %v103, inf
  %v204 = vsel %vm203, %v103, %v202
  %vm205 = vcmp.eq.f32.partialorder %v103, 0.0
  %v206 = vand.u32 %v103, 2147483648
  %v207 = vsel %vm205, %v206, %v204
  %v208 = vrsqrt.pop %v106
  %v209 = vmul.f32 %v106, %v208
  %vm210 = vcmp.eq.f32.partialorder %v106, inf
  %v211 = vsel %vm210, %v106, %v209
  %vm212 = vcmp.eq.f32.partialorder %v106, 0.0
  %v213 = vand.u32 %v106, 2147483648
  %v214 = vsel %vm212, %v213, %v211
  %v215 = vrsqrt.pop %v109
  %v216 = vmul.f32 %v109, %v215
  %vm217 = vcmp.eq.f32.partialorder %v109, inf
  %v218 = vsel %vm217, %v109, %v216
  %vm219 = vcmp.eq.f32.partialorder %v109, 0.0
  %v220 = vand.u32 %v109, 2147483648
  %v221 = vsel %vm219, %v220, %v218
  %vm222 = vcmp.gt.f32.partialorder %v116, 1.0
  %vm223 = vcmp.gt.f32.partialorder %v123, 1.0
  %vm224 = vcmp.gt.f32.partialorder %v130, 1.0
  %vm225 = vcmp.gt.f32.partialorder %v137, 1.0
  %vm226 = vcmp.gt.f32.partialorder %v144, 1.0
  %vm227 = vcmp.gt.f32.partialorder %v151, 1.0
  %vm228 = vcmp.gt.f32.partialorder %v158, 1.0
  %vm229 = vcmp.gt.f32.partialorder %v165, 1.0
  %vm230 = vcmp.gt.f32.partialorder %v172, 1.0
  %vm231 = vcmp.gt.f32.partialorder %v179, 1.0
  %vm232 = vcmp.gt.f32.partialorder %v186, 1.0
  %vm233 = vcmp.gt.f32.partialorder %v193, 1.0
  %vm234 = vcmp.gt.f32.partialorder %v200, 1.0
  %vm235 = vcmp.gt.f32.partialorder %v207, 1.0
  %vm236 = vcmp.gt.f32.partialorder %v214, 1.0
  %vm237 = vcmp.gt.f32.partialorder %v221, 1.0
  %v238 = vadd.f32 %v116, 1e-07
  %v239 = vadd.f32 %v123, 1e-07
  %v240 = vadd.f32 %v130, 1e-07
  %v241 = vadd.f32 %v137, 1e-07
  %v242 = vadd.f32 %v144, 1e-07
  %v243 = vadd.f32 %v151, 1e-07
  %v244 = vadd.f32 %v158, 1e-07
  %v245 = vadd.f32 %v165, 1e-07
  %v246 = vadd.f32 %v172, 1e-07
  %v247 = vadd.f32 %v179, 1e-07
  %v248 = vadd.f32 %v186, 1e-07
  %v249 = vadd.f32 %v193, 1e-07
  %v250 = vadd.f32 %v200, 1e-07
  %v251 = vadd.f32 %v207, 1e-07
  %v252 = vadd.f32 %v214, 1e-07
  %v253 = vadd.f32 %v221, 1e-07
  %v254 = vrcp.pop %v238
  %v255 = vmul.f32 1.0, %v254
  %v256 = vrcp.pop %v239
  %v257 = vmul.f32 1.0, %v256
  %v258 = vrcp.pop %v240
  %v259 = vmul.f32 1.0, %v258
  %v260 = vrcp.pop %v241
  %v261 = vmul.f32 1.0, %v260
  %v262 = vrcp.pop %v242
  %v263 = vmul.f32 1.0, %v262
  %v264 = vrcp.pop %v243
  %v265 = vmul.f32 1.0, %v264
  %v266 = vrcp.pop %v244
  %v267 = vmul.f32 1.0, %v266
  %v268 = vrcp.pop %v245
  %v269 = vmul.f32 1.0, %v268
  %v270 = vrcp.pop %v246
  %v271 = vmul.f32 1.0, %v270
  %v272 = vrcp.pop %v247
  %v273 = vmul.f32 1.0, %v272
  %v274 = vrcp.pop %v248
  %v275 = vmul.f32 1.0, %v274
  %v276 = vrcp.pop %v249
  %v277 = vmul.f32 1.0, %v276
  %v278 = vrcp.pop %v250
  %v279 = vmul.f32 1.0, %v278
  %v280 = vrcp.pop %v251
  %v281 = vmul.f32 1.0, %v280
  %v282 = vrcp.pop %v252
  %v283 = vmul.f32 1.0, %v282
  %v284 = vrcp.pop %v253
  %v285 = vmul.f32 1.0, %v284
  %v286 = vsel %vm222, %v255, 1.0
  %v287 = vsel %vm223, %v257, 1.0
  %v288 = vsel %vm224, %v259, 1.0
  %v289 = vsel %vm225, %v261, 1.0
  %v290 = vsel %vm226, %v263, 1.0
  %v291 = vsel %vm227, %v265, 1.0
  %v292 = vsel %vm228, %v267, 1.0
  %v293 = vsel %vm229, %v269, 1.0
  %v294 = vsel %vm230, %v271, 1.0
  %v295 = vsel %vm231, %v273, 1.0
  %v296 = vsel %vm232, %v275, 1.0
  %v297 = vsel %vm233, %v277, 1.0
  %v298 = vsel %vm234, %v279, 1.0
  %v299 = vsel %vm235, %v281, 1.0
  %v300 = vsel %vm236, %v283, 1.0
  %v301 = vsel %vm237, %v285, 1.0
  %v302 = vmul.f32 %v29, %v286
  %v303 = vmul.f32 %v30, %v287
  %v304 = vmul.f32 %v31, %v288
  %v305 = vmul.f32 %v32, %v289
  %v306 = vmul.f32 %v33, %v290
  %v307 = vmul.f32 %v34, %v291
  %v308 = vmul.f32 %v35, %v292
  %v309 = vmul.f32 %v36, %v293
  %v310 = vmul.f32 %v37, %v294
  %v311 = vmul.f32 %v38, %v295
  %v312 = vmul.f32 %v39, %v296
  %v313 = vmul.f32 %v40, %v297
  %v314 = vmul.f32 %v41, %v298
  %v315 = vmul.f32 %v42, %v299
  %v316 = vmul.f32 %v43, %v300
  %v317 = vmul.f32 %v44, %v301
  %v318 = vld [vmem:[%s0] sm:$0xff]
  %v319 = vld [vmem:[%s0 + $0x8] sm:$0xff]
  %v320 = vld [vmem:[%s0 + $0x10] sm:$0xff]
  %v321 = vld [vmem:[%s0 + $0x18] sm:$0xff]
  %v322 = vlaneseq
  %v323 = vand.u32 %v322, 127
  %324 = vset.pattern.permute.xlu0 0
  %325 = vperm.xlu0 %324, %v318
  %v326 = vpop.permute.xlu0 %325
  %327 = vset.pattern.permute.xlu0 0
  %328 = vperm.xlu0 %327, %v319
  %v329 = vpop.permute.xlu0 %328
  %330 = vset.pattern.permute.xlu0 0
  %331 = vperm.xlu0 %330, %v320
  %v332 = vpop.permute.xlu0 %331
  %333 = vset.pattern.permute.xlu0 0
  %334 = vperm.xlu0 %333, %v321
  %v335 = vpop.permute.xlu0 %334
  %vm336 = vcmp.eq.s32.totalorder %v323, %v326
  %vm337 = vcmp.eq.s32.totalorder %v323, %v329
  %vm338 = vcmp.eq.s32.totalorder %v323, %v332
  %vm339 = vcmp.eq.s32.totalorder %v323, %v335
  %v340 = vsel %vm336, 1, 0
  %v341 = vsel %vm337, 1, 0
  %v342 = vsel %vm338, 1, 0
  %v343 = vsel %vm339, 1, 0
  %v344 = vcvt.s32.f32 %v340
  %v345 = vcvt.s32.f32 %v341
  %v346 = vcvt.s32.f32 %v342
  %v347 = vcvt.s32.f32 %v343
  %348 = vmatprep.subr.mxu0 0.0
  %349 = vmatpush1.msra.mxu0 %v302
  %350 = vmatprep.subr.mxu0 0.0
  %351 = vmatpush1.msra.mxu0 %v303
  %352 = vmatprep.subr.mxu0 0.0
  %353 = vmatpush1.msra.mxu0 %v304
  %354 = vmatprep.subr.mxu0 0.0
  %355 = vmatpush1.msra.mxu0 %v305
  %356 = vmatprep.subr.mxu0 0.0
  %357 = vmatpush1.msra.mxu0 %v306
  %358 = vmatprep.subr.mxu0 0.0
  %359 = vmatpush1.msra.mxu0 %v307
  %360 = vmatprep.subr.mxu0 0.0
  %361 = vmatpush1.msra.mxu0 %v308
  %362 = vmatprep.subr.mxu0 0.0
  %363 = vmatpush1.msra.mxu0 %v309
  %364 = vmatprep.subr.mxu0 0.0
  %365 = vmatpush1.msra.mxu0 %v310
  %366 = vmatprep.subr.mxu0 0.0
  %367 = vmatpush1.msra.mxu0 %v311
  %368 = vmatprep.subr.mxu0 0.0
  %369 = vmatpush1.msra.mxu0 %v312
  %370 = vmatprep.subr.mxu0 0.0
  %371 = vmatpush1.msra.mxu0 %v313
  %372 = vmatprep.subr.mxu0 0.0
  %373 = vmatpush1.msra.mxu0 %v314
  %374 = vmatprep.subr.mxu0 0.0
  %375 = vmatpush1.msra.mxu0 %v315
  %376 = vmatprep.subr.mxu0 0.0
  %377 = vmatpush1.msra.mxu0 %v316
  %378 = vmatprep.subr.mxu0 0.0
  %379 = vmatpush1.msra.mxu0 %v317
  %380 = vmatprep.subr.mxu0 0.0
  %381 = vmatpush1.msra.mxu0 0.0
  %382 = vmatprep.subr.mxu0 0.0
  %383 = vmatpush1.msra.mxu0 0.0
  %384 = vmatprep.subr.mxu0 0.0
  %385 = vmatpush1.msra.mxu0 0.0
  %386 = vmatprep.subr.mxu0 0.0
  %387 = vmatpush1.msra.mxu0 0.0
  %388 = vmatprep.subr.mxu0 0.0
  %389 = vmatpush1.msra.mxu0 0.0
  %390 = vmatprep.subr.mxu0 0.0
  %391 = vmatpush1.msra.mxu0 0.0
  %392 = vmatprep.subr.mxu0 0.0
  %393 = vmatpush1.msra.mxu0 0.0
  %394 = vmatprep.subr.mxu0 0.0
  %395 = vmatpush1.msra.mxu0 0.0
  %396 = vmatprep.subr.mxu0 0.0
  %397 = vmatpush1.msra.mxu0 0.0
  %398 = vmatprep.subr.mxu0 0.0
  %399 = vmatpush1.msra.mxu0 0.0
  %400 = vmatprep.subr.mxu0 0.0
  %401 = vmatpush1.msra.mxu0 0.0
  %402 = vmatprep.subr.mxu0 0.0
  %403 = vmatpush1.msra.mxu0 0.0
  %404 = vmatprep.subr.mxu0 0.0
  %405 = vmatpush1.msra.mxu0 0.0
  %406 = vmatprep.subr.mxu0 0.0
  %407 = vmatpush1.msra.mxu0 0.0
  %408 = vmatprep.subr.mxu0 0.0
  %409 = vmatpush1.msra.mxu0 0.0
  %410 = vmatprep.subr.mxu0 0.0
  %411 = vmatpush1.msra.mxu0 0.0
  %412 = vmatprep.mubr.f32.mxu0 0.0
  %413 = vmatmul.mubr.f32.gmra.mrb[0].mxu0 %v344
  %v414 = vpop.f32.mrb[0].mxu0
  %v415 = vadd.f32 0.0, %v414
  %v416 = vpop.f32.mrb[0].mxu0
  %417 = vmatprep.mubr.f32.mxu0 0.0
  %418 = vmatmul.mubr.f32.gmra.mrb[0].mxu0 %v345
  %v419 = vpop.f32.mrb[0].mxu0
  %v420 = vadd.f32 0.0, %v419
  %v421 = vpop.f32.mrb[0].mxu0
  %422 = vmatprep.mubr.f32.mxu0 0.0
  %423 = vmatmul.mubr.f32.gmra.mrb[0].mxu0 %v346
  %v424 = vpop.f32.mrb[0].mxu0
  %v425 = vadd.f32 0.0, %v424
  %v426 = vpop.f32.mrb[0].mxu0
  %427 = vmatprep.mubr.f32.mxu0 0.0
  %428 = vmatmul.mubr.f32.gmra.mrb[0].mxu0 %v347
  %v429 = vpop.f32.mrb[0].mxu0
  %v430 = vadd.f32 0.0, %v429
  %v431 = vpop.f32.mrb[0].mxu0
  %432 = vdwg.mxu0
  %v433 = vld [vmem:[%s2] sm:$0xff]
  %v434 = vld [vmem:[%s2 + $0x8] sm:$0x3]
  %v435 = vld [vmem:[%s4] sm:$0x1]
  %v437 = vlaneseq
  %v438 = vshrl.u32 %v437, 7
  %v439 = vsub.s32 0, %v438
  %v440 = vrot.slane %v435, %v439
  %v443 = vsel %vm61, %v415, 0
  %v446 = vsel %vm61, %v420, 0
  %v449 = vsel %vm61, %v425, 0
  %v452 = vsel %vm61, %v430, 0
  %vm454 = vcmask 1041408
  %v456 = vsel %vm454, %v434, 0
  %458 = vmatprep.subr.mxu0 0.0
  %459 = vmatpush1.msra.mxu0 %v433
  %460 = vmatprep.subr.mxu0 0.0
  %461 = vmatpush1.msra.mxu0 %v456
  %462 = vmatprep.subr.mxu0 0.0
  %463 = vmatpush1.msra.mxu0 0.0
  %464 = vmatprep.subr.mxu0 0.0
  %465 = vmatpush1.msra.mxu0 0.0
  %466 = vmatprep.subr.mxu0 0.0
  %467 = vmatpush1.msra.mxu0 0.0
  %468 = vmatprep.subr.mxu0 0.0
  %469 = vmatpush1.msra.mxu0 0.0
  %470 = vmatprep.subr.mxu0 0.0
  %471 = vmatpush1.msra.mxu0 0.0
  %472 = vmatprep.subr.mxu0 0.0
  %473 = vmatpush1.msra.mxu0 0.0
  %474 = vmatprep.subr.mxu0 0.0
  %475 = vmatpush1.msra.mxu0 0.0
  %476 = vmatprep.subr.mxu0 0.0
  %477 = vmatpush1.msra.mxu0 0.0
  %478 = vmatprep.subr.mxu0 0.0
  %479 = vmatpush1.msra.mxu0 0.0
  %480 = vmatprep.subr.mxu0 0.0
  %481 = vmatpush1.msra.mxu0 0.0
  %482 = vmatprep.subr.mxu0 0.0
  %483 = vmatpush1.msra.mxu0 0.0
  %484 = vmatprep.subr.mxu0 0.0
  %485 = vmatpush1.msra.mxu0 0.0
  %486 = vmatprep.subr.mxu0 0.0
  %487 = vmatpush1.msra.mxu0 0.0
  %488 = vmatprep.subr.mxu0 0.0
  %489 = vmatpush1.msra.mxu0 0.0
  %490 = vmatprep.subr.mxu0 0.0
  %491 = vmatpush1.msra.mxu0 0.0
  %492 = vmatprep.subr.mxu0 0.0
  %493 = vmatpush1.msra.mxu0 0.0
  %494 = vmatprep.subr.mxu0 0.0
  %495 = vmatpush1.msra.mxu0 0.0
  %496 = vmatprep.subr.mxu0 0.0
  %497 = vmatpush1.msra.mxu0 0.0
  %498 = vmatprep.subr.mxu0 0.0
  %499 = vmatpush1.msra.mxu0 0.0
  %500 = vmatprep.subr.mxu0 0.0
  %501 = vmatpush1.msra.mxu0 0.0
  %502 = vmatprep.subr.mxu0 0.0
  %503 = vmatpush1.msra.mxu0 0.0
  %504 = vmatprep.subr.mxu0 0.0
  %505 = vmatpush1.msra.mxu0 0.0
  %506 = vmatprep.subr.mxu0 0.0
  %507 = vmatpush1.msra.mxu0 0.0
  %508 = vmatprep.subr.mxu0 0.0
  %509 = vmatpush1.msra.mxu0 0.0
  %510 = vmatprep.subr.mxu0 0.0
  %511 = vmatpush1.msra.mxu0 0.0
  %512 = vmatprep.subr.mxu0 0.0
  %513 = vmatpush1.msra.mxu0 0.0
  %514 = vmatprep.subr.mxu0 0.0
  %515 = vmatpush1.msra.mxu0 0.0
  %516 = vmatprep.subr.mxu0 0.0
  %517 = vmatpush1.msra.mxu0 0.0
  %518 = vmatprep.subr.mxu0 0.0
  %519 = vmatpush1.msra.mxu0 0.0
  %520 = vmatprep.subr.mxu0 0.0
  %521 = vmatpush1.msra.mxu0 0.0
  %522 = vmatprep.mubr.f32.mxu0 0.0
  %523 = vmatmul.mubr.f32.gmra.mrb[0].mxu0 %v443
  %v524 = vpop.f32.mrb[0].mxu0
  %v525 = vadd.f32 %v440, %v524
  %v526 = vpop.f32.mrb[0].mxu0
  %527 = vmatprep.mubr.f32.mxu0 0.0
  %528 = vmatmul.mubr.f32.gmra.mrb[0].mxu0 %v446
  %v529 = vpop.f32.mrb[0].mxu0
  %v530 = vadd.f32 %v440, %v529
  %v531 = vpop.f32.mrb[0].mxu0
  %532 = vmatprep.mubr.f32.mxu0 0.0
  %533 = vmatmul.mubr.f32.gmra.mrb[0].mxu0 %v449
  %v534 = vpop.f32.mrb[0].mxu0
  %v535 = vadd.f32 %v440, %v534
  %v536 = vpop.f32.mrb[0].mxu0
  %537 = vmatprep.mubr.f32.mxu0 0.0
  %538 = vmatmul.mubr.f32.gmra.mrb[0].mxu0 %v452
  %v539 = vpop.f32.mrb[0].mxu0
  %v540 = vadd.f32 %v440, %v539
  %v541 = vpop.f32.mrb[0].mxu0
  %542 = vdwg.mxu0
  %s543 = scalar_lea.vmem %s2, 16
  %v544 = vld [vmem:[%s543] sm:$0xff]
  %v545 = vld [vmem:[%s543 + $0x8] sm:$0x3]
  %s546 = scalar_lea.vmem %s4, 1
  %v547 = vld [vmem:[%s546] sm:$0x1]
  %v549 = vlaneseq
  %v550 = vshrl.u32 %v549, 7
  %v551 = vsub.s32 0, %v550
  %v552 = vrot.slane %v547, %v551
  %v555 = vsel %vm454, %v545, 0
  %557 = vmatprep.subr.mxu0 0.0
  %558 = vmatpush1.msra.mxu0 %v544
  %559 = vmatprep.subr.mxu0 0.0
  %560 = vmatpush1.msra.mxu0 %v555
  %561 = vmatprep.subr.mxu0 0.0
  %562 = vmatpush1.msra.mxu0 0.0
  %563 = vmatprep.subr.mxu0 0.0
  %564 = vmatpush1.msra.mxu0 0.0
  %565 = vmatprep.subr.mxu0 0.0
  %566 = vmatpush1.msra.mxu0 0.0
  %567 = vmatprep.subr.mxu0 0.0
  %568 = vmatpush1.msra.mxu0 0.0
  %569 = vmatprep.subr.mxu0 0.0
  %570 = vmatpush1.msra.mxu0 0.0
  %571 = vmatprep.subr.mxu0 0.0
  %572 = vmatpush1.msra.mxu0 0.0
  %573 = vmatprep.subr.mxu0 0.0
  %574 = vmatpush1.msra.mxu0 0.0
  %575 = vmatprep.subr.mxu0 0.0
  %576 = vmatpush1.msra.mxu0 0.0
  %577 = vmatprep.subr.mxu0 0.0
  %578 = vmatpush1.msra.mxu0 0.0
  %579 = vmatprep.subr.mxu0 0.0
  %580 = vmatpush1.msra.mxu0 0.0
  %581 = vmatprep.subr.mxu0 0.0
  %582 = vmatpush1.msra.mxu0 0.0
  %583 = vmatprep.subr.mxu0 0.0
  %584 = vmatpush1.msra.mxu0 0.0
  %585 = vmatprep.subr.mxu0 0.0
  %586 = vmatpush1.msra.mxu0 0.0
  %587 = vmatprep.subr.mxu0 0.0
  %588 = vmatpush1.msra.mxu0 0.0
  %589 = vmatprep.subr.mxu0 0.0
  %590 = vmatpush1.msra.mxu0 0.0
  %591 = vmatprep.subr.mxu0 0.0
  %592 = vmatpush1.msra.mxu0 0.0
  %593 = vmatprep.subr.mxu0 0.0
  %594 = vmatpush1.msra.mxu0 0.0
  %595 = vmatprep.subr.mxu0 0.0
  %596 = vmatpush1.msra.mxu0 0.0
  %597 = vmatprep.subr.mxu0 0.0
  %598 = vmatpush1.msra.mxu0 0.0
  %599 = vmatprep.subr.mxu0 0.0
  %600 = vmatpush1.msra.mxu0 0.0
  %601 = vmatprep.subr.mxu0 0.0
  %602 = vmatpush1.msra.mxu0 0.0
  %603 = vmatprep.subr.mxu0 0.0
  %604 = vmatpush1.msra.mxu0 0.0
  %605 = vmatprep.subr.mxu0 0.0
  %606 = vmatpush1.msra.mxu0 0.0
  %607 = vmatprep.subr.mxu0 0.0
  %608 = vmatpush1.msra.mxu0 0.0
  %609 = vmatprep.subr.mxu0 0.0
  %610 = vmatpush1.msra.mxu0 0.0
  %611 = vmatprep.subr.mxu0 0.0
  %612 = vmatpush1.msra.mxu0 0.0
  %613 = vmatprep.subr.mxu0 0.0
  %614 = vmatpush1.msra.mxu0 0.0
  %615 = vmatprep.subr.mxu0 0.0
  %616 = vmatpush1.msra.mxu0 0.0
  %617 = vmatprep.subr.mxu0 0.0
  %618 = vmatpush1.msra.mxu0 0.0
  %619 = vmatprep.subr.mxu0 0.0
  %620 = vmatpush1.msra.mxu0 0.0
  %621 = vmatprep.mubr.f32.mxu0 0.0
  %622 = vmatmul.mubr.f32.gmra.mrb[0].mxu0 %v443
  %v623 = vpop.f32.mrb[0].mxu0
  %v624 = vadd.f32 %v552, %v623
  %v625 = vpop.f32.mrb[0].mxu0
  %626 = vmatprep.mubr.f32.mxu0 0.0
  %627 = vmatmul.mubr.f32.gmra.mrb[0].mxu0 %v446
  %v628 = vpop.f32.mrb[0].mxu0
  %v629 = vadd.f32 %v552, %v628
  %v630 = vpop.f32.mrb[0].mxu0
  %631 = vmatprep.mubr.f32.mxu0 0.0
  %632 = vmatmul.mubr.f32.gmra.mrb[0].mxu0 %v449
  %v633 = vpop.f32.mrb[0].mxu0
  %v634 = vadd.f32 %v552, %v633
  %v635 = vpop.f32.mrb[0].mxu0
  %636 = vmatprep.mubr.f32.mxu0 0.0
  %637 = vmatmul.mubr.f32.gmra.mrb[0].mxu0 %v452
  %v638 = vpop.f32.mrb[0].mxu0
  %v639 = vadd.f32 %v552, %v638
  %v640 = vpop.f32.mrb[0].mxu0
  %641 = vdwg.mxu0
  %s642 = scalar_lea.vmem %s2, 32
  %v643 = vld [vmem:[%s642] sm:$0xff]
  %v644 = vld [vmem:[%s642 + $0x8] sm:$0x3]
  %s645 = scalar_lea.vmem %s4, 2
  %v646 = vld [vmem:[%s645] sm:$0x1]
  %v648 = vlaneseq
  %v649 = vshrl.u32 %v648, 7
  %v650 = vsub.s32 0, %v649
  %v651 = vrot.slane %v646, %v650
  %v654 = vsel %vm454, %v644, 0
  %656 = vmatprep.subr.mxu0 0.0
  %657 = vmatpush1.msra.mxu0 %v643
  %658 = vmatprep.subr.mxu0 0.0
  %659 = vmatpush1.msra.mxu0 %v654
  %660 = vmatprep.subr.mxu0 0.0
  %661 = vmatpush1.msra.mxu0 0.0
  %662 = vmatprep.subr.mxu0 0.0
  %663 = vmatpush1.msra.mxu0 0.0
  %664 = vmatprep.subr.mxu0 0.0
  %665 = vmatpush1.msra.mxu0 0.0
  %666 = vmatprep.subr.mxu0 0.0
  %667 = vmatpush1.msra.mxu0 0.0
  %668 = vmatprep.subr.mxu0 0.0
  %669 = vmatpush1.msra.mxu0 0.0
  %670 = vmatprep.subr.mxu0 0.0
  %671 = vmatpush1.msra.mxu0 0.0
  %672 = vmatprep.subr.mxu0 0.0
  %673 = vmatpush1.msra.mxu0 0.0
  %674 = vmatprep.subr.mxu0 0.0
  %675 = vmatpush1.msra.mxu0 0.0
  %676 = vmatprep.subr.mxu0 0.0
  %677 = vmatpush1.msra.mxu0 0.0
  %678 = vmatprep.subr.mxu0 0.0
  %679 = vmatpush1.msra.mxu0 0.0
  %680 = vmatprep.subr.mxu0 0.0
  %681 = vmatpush1.msra.mxu0 0.0
  %682 = vmatprep.subr.mxu0 0.0
  %683 = vmatpush1.msra.mxu0 0.0
  %684 = vmatprep.subr.mxu0 0.0
  %685 = vmatpush1.msra.mxu0 0.0
  %686 = vmatprep.subr.mxu0 0.0
  %687 = vmatpush1.msra.mxu0 0.0
  %688 = vmatprep.subr.mxu0 0.0
  %689 = vmatpush1.msra.mxu0 0.0
  %690 = vmatprep.subr.mxu0 0.0
  %691 = vmatpush1.msra.mxu0 0.0
  %692 = vmatprep.subr.mxu0 0.0
  %693 = vmatpush1.msra.mxu0 0.0
  %694 = vmatprep.subr.mxu0 0.0
  %695 = vmatpush1.msra.mxu0 0.0
  %696 = vmatprep.subr.mxu0 0.0
  %697 = vmatpush1.msra.mxu0 0.0
  %698 = vmatprep.subr.mxu0 0.0
  %699 = vmatpush1.msra.mxu0 0.0
  %700 = vmatprep.subr.mxu0 0.0
  %701 = vmatpush1.msra.mxu0 0.0
  %702 = vmatprep.subr.mxu0 0.0
  %703 = vmatpush1.msra.mxu0 0.0
  %704 = vmatprep.subr.mxu0 0.0
  %705 = vmatpush1.msra.mxu0 0.0
  %706 = vmatprep.subr.mxu0 0.0
  %707 = vmatpush1.msra.mxu0 0.0
  %708 = vmatprep.subr.mxu0 0.0
  %709 = vmatpush1.msra.mxu0 0.0
  %710 = vmatprep.subr.mxu0 0.0
  %711 = vmatpush1.msra.mxu0 0.0
  %712 = vmatprep.subr.mxu0 0.0
  %713 = vmatpush1.msra.mxu0 0.0
  %714 = vmatprep.subr.mxu0 0.0
  %715 = vmatpush1.msra.mxu0 0.0
  %716 = vmatprep.subr.mxu0 0.0
  %717 = vmatpush1.msra.mxu0 0.0
  %718 = vmatprep.subr.mxu0 0.0
  %719 = vmatpush1.msra.mxu0 0.0
  %720 = vmatprep.mubr.f32.mxu0 0.0
  %721 = vmatmul.mubr.f32.gmra.mrb[0].mxu0 %v443
  %v722 = vpop.f32.mrb[0].mxu0
  %v723 = vadd.f32 %v651, %v722
  %v724 = vpop.f32.mrb[0].mxu0
  %725 = vmatprep.mubr.f32.mxu0 0.0
  %726 = vmatmul.mubr.f32.gmra.mrb[0].mxu0 %v446
  %v727 = vpop.f32.mrb[0].mxu0
  %v728 = vadd.f32 %v651, %v727
  %v729 = vpop.f32.mrb[0].mxu0
  %730 = vmatprep.mubr.f32.mxu0 0.0
  %731 = vmatmul.mubr.f32.gmra.mrb[0].mxu0 %v449
  %v732 = vpop.f32.mrb[0].mxu0
  %v733 = vadd.f32 %v651, %v732
  %v734 = vpop.f32.mrb[0].mxu0
  %735 = vmatprep.mubr.f32.mxu0 0.0
  %736 = vmatmul.mubr.f32.gmra.mrb[0].mxu0 %v452
  %v737 = vpop.f32.mrb[0].mxu0
  %v738 = vadd.f32 %v651, %v737
  %v739 = vpop.f32.mrb[0].mxu0
  %740 = vdwg.mxu0
  %s741 = scalar_lea.vmem %s2, 48
  %v742 = vld [vmem:[%s741] sm:$0xff]
  %v743 = vld [vmem:[%s741 + $0x8] sm:$0x3]
  %s744 = scalar_lea.vmem %s4, 3
  %v745 = vld [vmem:[%s744] sm:$0x1]
  %v747 = vlaneseq
  %v748 = vshrl.u32 %v747, 7
  %v749 = vsub.s32 0, %v748
  %v750 = vrot.slane %v745, %v749
  %v753 = vsel %vm454, %v743, 0
  %755 = vmatprep.subr.mxu0 0.0
  %756 = vmatpush1.msra.mxu0 %v742
  %757 = vmatprep.subr.mxu0 0.0
  %758 = vmatpush1.msra.mxu0 %v753
  %759 = vmatprep.subr.mxu0 0.0
  %760 = vmatpush1.msra.mxu0 0.0
  %761 = vmatprep.subr.mxu0 0.0
  %762 = vmatpush1.msra.mxu0 0.0
  %763 = vmatprep.subr.mxu0 0.0
  %764 = vmatpush1.msra.mxu0 0.0
  %765 = vmatprep.subr.mxu0 0.0
  %766 = vmatpush1.msra.mxu0 0.0
  %767 = vmatprep.subr.mxu0 0.0
  %768 = vmatpush1.msra.mxu0 0.0
  %769 = vmatprep.subr.mxu0 0.0
  %770 = vmatpush1.msra.mxu0 0.0
  %771 = vmatprep.subr.mxu0 0.0
  %772 = vmatpush1.msra.mxu0 0.0
  %773 = vmatprep.subr.mxu0 0.0
  %774 = vmatpush1.msra.mxu0 0.0
  %775 = vmatprep.subr.mxu0 0.0
  %776 = vmatpush1.msra.mxu0 0.0
  %777 = vmatprep.subr.mxu0 0.0
  %778 = vmatpush1.msra.mxu0 0.0
  %779 = vmatprep.subr.mxu0 0.0
  %780 = vmatpush1.msra.mxu0 0.0
  %781 = vmatprep.subr.mxu0 0.0
  %782 = vmatpush1.msra.mxu0 0.0
  %783 = vmatprep.subr.mxu0 0.0
  %784 = vmatpush1.msra.mxu0 0.0
  %785 = vmatprep.subr.mxu0 0.0
  %786 = vmatpush1.msra.mxu0 0.0
  %787 = vmatprep.subr.mxu0 0.0
  %788 = vmatpush1.msra.mxu0 0.0
  %789 = vmatprep.subr.mxu0 0.0
  %790 = vmatpush1.msra.mxu0 0.0
  %791 = vmatprep.subr.mxu0 0.0
  %792 = vmatpush1.msra.mxu0 0.0
  %793 = vmatprep.subr.mxu0 0.0
  %794 = vmatpush1.msra.mxu0 0.0
  %795 = vmatprep.subr.mxu0 0.0
  %796 = vmatpush1.msra.mxu0 0.0
  %797 = vmatprep.subr.mxu0 0.0
  %798 = vmatpush1.msra.mxu0 0.0
  %799 = vmatprep.subr.mxu0 0.0
  %800 = vmatpush1.msra.mxu0 0.0
  %801 = vmatprep.subr.mxu0 0.0
  %802 = vmatpush1.msra.mxu0 0.0
  %803 = vmatprep.subr.mxu0 0.0
  %804 = vmatpush1.msra.mxu0 0.0
  %805 = vmatprep.subr.mxu0 0.0
  %806 = vmatpush1.msra.mxu0 0.0
  %807 = vmatprep.subr.mxu0 0.0
  %808 = vmatpush1.msra.mxu0 0.0
  %809 = vmatprep.subr.mxu0 0.0
  %810 = vmatpush1.msra.mxu0 0.0
  %811 = vmatprep.subr.mxu0 0.0
  %812 = vmatpush1.msra.mxu0 0.0
  %813 = vmatprep.subr.mxu0 0.0
  %814 = vmatpush1.msra.mxu0 0.0
  %815 = vmatprep.subr.mxu0 0.0
  %816 = vmatpush1.msra.mxu0 0.0
  %817 = vmatprep.subr.mxu0 0.0
  %818 = vmatpush1.msra.mxu0 0.0
  %819 = vmatprep.mubr.f32.mxu0 0.0
  %820 = vmatmul.mubr.f32.gmra.mrb[0].mxu0 %v443
  %v821 = vpop.f32.mrb[0].mxu0
  %v822 = vadd.f32 %v750, %v821
  %v823 = vpop.f32.mrb[0].mxu0
  %824 = vmatprep.mubr.f32.mxu0 0.0
  %825 = vmatmul.mubr.f32.gmra.mrb[0].mxu0 %v446
  %v826 = vpop.f32.mrb[0].mxu0
  %v827 = vadd.f32 %v750, %v826
  %v828 = vpop.f32.mrb[0].mxu0
  %829 = vmatprep.mubr.f32.mxu0 0.0
  %830 = vmatmul.mubr.f32.gmra.mrb[0].mxu0 %v449
  %v831 = vpop.f32.mrb[0].mxu0
  %v832 = vadd.f32 %v750, %v831
  %v833 = vpop.f32.mrb[0].mxu0
  %834 = vmatprep.mubr.f32.mxu0 0.0
  %835 = vmatmul.mubr.f32.gmra.mrb[0].mxu0 %v452
  %v836 = vpop.f32.mrb[0].mxu0
  %v837 = vadd.f32 %v750, %v836
  %v838 = vpop.f32.mrb[0].mxu0
  %839 = vdwg.mxu0
  %s840 = scalar_lea.vmem %s2, 64
  %v841 = vld [vmem:[%s840] sm:$0xff]
  %v842 = vld [vmem:[%s840 + $0x8] sm:$0x3]
  %s843 = scalar_lea.vmem %s4, 4
  %v844 = vld [vmem:[%s843] sm:$0x1]
  %v846 = vlaneseq
  %v847 = vshrl.u32 %v846, 7
  %v848 = vsub.s32 0, %v847
  %v849 = vrot.slane %v844, %v848
  %v852 = vsel %vm454, %v842, 0
  %854 = vmatprep.subr.mxu0 0.0
  %855 = vmatpush1.msra.mxu0 %v841
  %856 = vmatprep.subr.mxu0 0.0
  %857 = vmatpush1.msra.mxu0 %v852
  %858 = vmatprep.subr.mxu0 0.0
  %859 = vmatpush1.msra.mxu0 0.0
  %860 = vmatprep.subr.mxu0 0.0
  %861 = vmatpush1.msra.mxu0 0.0
  %862 = vmatprep.subr.mxu0 0.0
  %863 = vmatpush1.msra.mxu0 0.0
  %864 = vmatprep.subr.mxu0 0.0
  %865 = vmatpush1.msra.mxu0 0.0
  %866 = vmatprep.subr.mxu0 0.0
  %867 = vmatpush1.msra.mxu0 0.0
  %868 = vmatprep.subr.mxu0 0.0
  %869 = vmatpush1.msra.mxu0 0.0
  %870 = vmatprep.subr.mxu0 0.0
  %871 = vmatpush1.msra.mxu0 0.0
  %872 = vmatprep.subr.mxu0 0.0
  %873 = vmatpush1.msra.mxu0 0.0
  %874 = vmatprep.subr.mxu0 0.0
  %875 = vmatpush1.msra.mxu0 0.0
  %876 = vmatprep.subr.mxu0 0.0
  %877 = vmatpush1.msra.mxu0 0.0
  %878 = vmatprep.subr.mxu0 0.0
  %879 = vmatpush1.msra.mxu0 0.0
  %880 = vmatprep.subr.mxu0 0.0
  %881 = vmatpush1.msra.mxu0 0.0
  %882 = vmatprep.subr.mxu0 0.0
  %883 = vmatpush1.msra.mxu0 0.0
  %884 = vmatprep.subr.mxu0 0.0
  %885 = vmatpush1.msra.mxu0 0.0
  %886 = vmatprep.subr.mxu0 0.0
  %887 = vmatpush1.msra.mxu0 0.0
  %888 = vmatprep.subr.mxu0 0.0
  %889 = vmatpush1.msra.mxu0 0.0
  %890 = vmatprep.subr.mxu0 0.0
  %891 = vmatpush1.msra.mxu0 0.0
  %892 = vmatprep.subr.mxu0 0.0
  %893 = vmatpush1.msra.mxu0 0.0
  %894 = vmatprep.subr.mxu0 0.0
  %895 = vmatpush1.msra.mxu0 0.0
  %896 = vmatprep.subr.mxu0 0.0
  %897 = vmatpush1.msra.mxu0 0.0
  %898 = vmatprep.subr.mxu0 0.0
  %899 = vmatpush1.msra.mxu0 0.0
  %900 = vmatprep.subr.mxu0 0.0
  %901 = vmatpush1.msra.mxu0 0.0
  %902 = vmatprep.subr.mxu0 0.0
  %903 = vmatpush1.msra.mxu0 0.0
  %904 = vmatprep.subr.mxu0 0.0
  %905 = vmatpush1.msra.mxu0 0.0
  %906 = vmatprep.subr.mxu0 0.0
  %907 = vmatpush1.msra.mxu0 0.0
  %908 = vmatprep.subr.mxu0 0.0
  %909 = vmatpush1.msra.mxu0 0.0
  %910 = vmatprep.subr.mxu0 0.0
  %911 = vmatpush1.msra.mxu0 0.0
  %912 = vmatprep.subr.mxu0 0.0
  %913 = vmatpush1.msra.mxu0 0.0
  %914 = vmatprep.subr.mxu0 0.0
  %915 = vmatpush1.msra.mxu0 0.0
  %916 = vmatprep.subr.mxu0 0.0
  %917 = vmatpush1.msra.mxu0 0.0
  %918 = vmatprep.mubr.f32.mxu0 0.0
  %919 = vmatmul.mubr.f32.gmra.mrb[0].mxu0 %v443
  %v920 = vpop.f32.mrb[0].mxu0
  %v921 = vadd.f32 %v849, %v920
  %v922 = vpop.f32.mrb[0].mxu0
  %923 = vmatprep.mubr.f32.mxu0 0.0
  %924 = vmatmul.mubr.f32.gmra.mrb[0].mxu0 %v446
  %v925 = vpop.f32.mrb[0].mxu0
  %v926 = vadd.f32 %v849, %v925
  %v927 = vpop.f32.mrb[0].mxu0
  %928 = vmatprep.mubr.f32.mxu0 0.0
  %929 = vmatmul.mubr.f32.gmra.mrb[0].mxu0 %v449
  %v930 = vpop.f32.mrb[0].mxu0
  %v931 = vadd.f32 %v849, %v930
  %v932 = vpop.f32.mrb[0].mxu0
  %933 = vmatprep.mubr.f32.mxu0 0.0
  %934 = vmatmul.mubr.f32.gmra.mrb[0].mxu0 %v452
  %v935 = vpop.f32.mrb[0].mxu0
  %v936 = vadd.f32 %v849, %v935
  %v937 = vpop.f32.mrb[0].mxu0
  %938 = vdwg.mxu0
  %s939 = scalar_lea.vmem %s2, 80
  %v940 = vld [vmem:[%s939] sm:$0xff]
  %v941 = vld [vmem:[%s939 + $0x8] sm:$0x3]
  %s942 = scalar_lea.vmem %s4, 5
  %v943 = vld [vmem:[%s942] sm:$0x1]
  %v945 = vlaneseq
  %v946 = vshrl.u32 %v945, 7
  %v947 = vsub.s32 0, %v946
  %v948 = vrot.slane %v943, %v947
  %v951 = vsel %vm454, %v941, 0
  %953 = vmatprep.subr.mxu0 0.0
  %954 = vmatpush1.msra.mxu0 %v940
  %955 = vmatprep.subr.mxu0 0.0
  %956 = vmatpush1.msra.mxu0 %v951
  %957 = vmatprep.subr.mxu0 0.0
  %958 = vmatpush1.msra.mxu0 0.0
  %959 = vmatprep.subr.mxu0 0.0
  %960 = vmatpush1.msra.mxu0 0.0
  %961 = vmatprep.subr.mxu0 0.0
  %962 = vmatpush1.msra.mxu0 0.0
  %963 = vmatprep.subr.mxu0 0.0
  %964 = vmatpush1.msra.mxu0 0.0
  %965 = vmatprep.subr.mxu0 0.0
  %966 = vmatpush1.msra.mxu0 0.0
  %967 = vmatprep.subr.mxu0 0.0
  %968 = vmatpush1.msra.mxu0 0.0
  %969 = vmatprep.subr.mxu0 0.0
  %970 = vmatpush1.msra.mxu0 0.0
  %971 = vmatprep.subr.mxu0 0.0
  %972 = vmatpush1.msra.mxu0 0.0
  %973 = vmatprep.subr.mxu0 0.0
  %974 = vmatpush1.msra.mxu0 0.0
  %975 = vmatprep.subr.mxu0 0.0
  %976 = vmatpush1.msra.mxu0 0.0
  %977 = vmatprep.subr.mxu0 0.0
  %978 = vmatpush1.msra.mxu0 0.0
  %979 = vmatprep.subr.mxu0 0.0
  %980 = vmatpush1.msra.mxu0 0.0
  %981 = vmatprep.subr.mxu0 0.0
  %982 = vmatpush1.msra.mxu0 0.0
  %983 = vmatprep.subr.mxu0 0.0
  %984 = vmatpush1.msra.mxu0 0.0
  %985 = vmatprep.subr.mxu0 0.0
  %986 = vmatpush1.msra.mxu0 0.0
  %987 = vmatprep.subr.mxu0 0.0
  %988 = vmatpush1.msra.mxu0 0.0
  %989 = vmatprep.subr.mxu0 0.0
  %990 = vmatpush1.msra.mxu0 0.0
  %991 = vmatprep.subr.mxu0 0.0
  %992 = vmatpush1.msra.mxu0 0.0
  %993 = vmatprep.subr.mxu0 0.0
  %994 = vmatpush1.msra.mxu0 0.0
  %995 = vmatprep.subr.mxu0 0.0
  %996 = vmatpush1.msra.mxu0 0.0
  %997 = vmatprep.subr.mxu0 0.0
  %998 = vmatpush1.msra.mxu0 0.0
  %999 = vmatprep.subr.mxu0 0.0
  %1000 = vmatpush1.msra.mxu0 0.0
  %1001 = vmatprep.subr.mxu0 0.0
  %1002 = vmatpush1.msra.mxu0 0.0
  %1003 = vmatprep.subr.mxu0 0.0
  %1004 = vmatpush1.msra.mxu0 0.0
  %1005 = vmatprep.subr.mxu0 0.0
  %1006 = vmatpush1.msra.mxu0 0.0
  %1007 = vmatprep.subr.mxu0 0.0
  %1008 = vmatpush1.msra.mxu0 0.0
  %1009 = vmatprep.subr.mxu0 0.0
  %1010 = vmatpush1.msra.mxu0 0.0
  %1011 = vmatprep.subr.mxu0 0.0
  %1012 = vmatpush1.msra.mxu0 0.0
  %1013 = vmatprep.subr.mxu0 0.0
  %1014 = vmatpush1.msra.mxu0 0.0
  %1015 = vmatprep.subr.mxu0 0.0
  %1016 = vmatpush1.msra.mxu0 0.0
  %1017 = vmatprep.mubr.f32.mxu0 0.0
  %1018 = vmatmul.mubr.f32.gmra.mrb[0].mxu0 %v443
  %v1019 = vpop.f32.mrb[0].mxu0
  %v1020 = vadd.f32 %v948, %v1019
  %v1021 = vpop.f32.mrb[0].mxu0
  %1022 = vmatprep.mubr.f32.mxu0 0.0
  %1023 = vmatmul.mubr.f32.gmra.mrb[0].mxu0 %v446
  %v1024 = vpop.f32.mrb[0].mxu0
  %v1025 = vadd.f32 %v948, %v1024
  %v1026 = vpop.f32.mrb[0].mxu0
  %1027 = vmatprep.mubr.f32.mxu0 0.0
  %1028 = vmatmul.mubr.f32.gmra.mrb[0].mxu0 %v449
  %v1029 = vpop.f32.mrb[0].mxu0
  %v1030 = vadd.f32 %v948, %v1029
  %v1031 = vpop.f32.mrb[0].mxu0
  %1032 = vmatprep.mubr.f32.mxu0 0.0
  %1033 = vmatmul.mubr.f32.gmra.mrb[0].mxu0 %v452
  %v1034 = vpop.f32.mrb[0].mxu0
  %v1035 = vadd.f32 %v948, %v1034
  %v1036 = vpop.f32.mrb[0].mxu0
  %1037 = vdwg.mxu0
  %v1038 = vld [vmem:[%s3] sm:$0xff]
  %v1039 = vld [vmem:[%s3 + $0x8] sm:$0xff]
  %v1040 = vld [vmem:[%s3 + $0x10] sm:$0xff]
  %v1041 = vld [vmem:[%s3 + $0x18] sm:$0xff]
  %v1042 = vld [vmem:[%s3 + $0x20] sm:$0xff]
  %v1043 = vld [vmem:[%s3 + $0x28] sm:$0xff]
  %v1044 = vld [vmem:[%s3 + $0x30] sm:$0x3]
  %s1045 = scalar_lea.vmem %s3, 56
  %v1046 = vld [vmem:[%s1045] sm:$0xff]
  %v1047 = vld [vmem:[%s1045 + $0x8] sm:$0xff]
  %v1048 = vld [vmem:[%s1045 + $0x10] sm:$0xff]
  %v1049 = vld [vmem:[%s1045 + $0x18] sm:$0xff]
  %v1050 = vld [vmem:[%s1045 + $0x20] sm:$0xff]
  %v1051 = vld [vmem:[%s1045 + $0x28] sm:$0xff]
  %v1052 = vld [vmem:[%s1045 + $0x30] sm:$0x3]
  %s1053 = scalar_lea.vmem %s3, 112
  %v1054 = vld [vmem:[%s1053] sm:$0xff]
  %v1055 = vld [vmem:[%s1053 + $0x8] sm:$0xff]
  %v1056 = vld [vmem:[%s1053 + $0x10] sm:$0xff]
  %v1057 = vld [vmem:[%s1053 + $0x18] sm:$0xff]
  %v1058 = vld [vmem:[%s1053 + $0x20] sm:$0xff]
  %v1059 = vld [vmem:[%s1053 + $0x28] sm:$0xff]
  %v1060 = vld [vmem:[%s1053 + $0x30] sm:$0x3]
  %s1061 = scalar_lea.vmem %s3, 168
  %v1062 = vld [vmem:[%s1061] sm:$0xff]
  %v1063 = vld [vmem:[%s1061 + $0x8] sm:$0xff]
  %v1064 = vld [vmem:[%s1061 + $0x10] sm:$0xff]
  %v1065 = vld [vmem:[%s1061 + $0x18] sm:$0xff]
  %v1066 = vld [vmem:[%s1061 + $0x20] sm:$0xff]
  %v1067 = vld [vmem:[%s1061 + $0x28] sm:$0xff]
  %v1068 = vld [vmem:[%s1061 + $0x30] sm:$0x3]
  %s1069 = scalar_lea.vmem %s3, 224
  %v1070 = vld [vmem:[%s1069] sm:$0xff]
  %v1071 = vld [vmem:[%s1069 + $0x8] sm:$0xff]
  %v1072 = vld [vmem:[%s1069 + $0x10] sm:$0xff]
  %v1073 = vld [vmem:[%s1069 + $0x18] sm:$0xff]
  %v1074 = vld [vmem:[%s1069 + $0x20] sm:$0xff]
  %v1075 = vld [vmem:[%s1069 + $0x28] sm:$0xff]
  %v1076 = vld [vmem:[%s1069 + $0x30] sm:$0x3]
  %s1077 = scalar_lea.vmem %s3, 280
  %v1078 = vld [vmem:[%s1077] sm:$0xff]
  %v1079 = vld [vmem:[%s1077 + $0x8] sm:$0xff]
  %v1080 = vld [vmem:[%s1077 + $0x10] sm:$0xff]
  %v1081 = vld [vmem:[%s1077 + $0x18] sm:$0xff]
  %v1082 = vld [vmem:[%s1077 + $0x20] sm:$0xff]
  %v1083 = vld [vmem:[%s1077 + $0x28] sm:$0xff]
  %v1084 = vld [vmem:[%s1077 + $0x30] sm:$0x3]
  %v1085 = vld [vmem:[%s5] sm:$0x1]
  %s1086 = scalar_lea.vmem %s5, 1
  %v1087 = vld [vmem:[%s1086] sm:$0x1]
  %s1088 = scalar_lea.vmem %s5, 2
  %v1089 = vld [vmem:[%s1088] sm:$0x1]
  %s1090 = scalar_lea.vmem %s5, 3
  %v1091 = vld [vmem:[%s1090] sm:$0x1]
  %s1092 = scalar_lea.vmem %s5, 4
  %v1093 = vld [vmem:[%s1092] sm:$0x1]
  %s1094 = scalar_lea.vmem %s5, 5
  %v1095 = vld [vmem:[%s1094] sm:$0x1]
  %v1097 = vlaneseq
  %v1098 = vshrl.u32 %v1097, 7
  %v1099 = vsub.s32 0, %v1098
  %v1100 = vrot.slane %v1085, %v1099
  %vm1102 = vcmask 408576
  %v1104 = vsel %vm1102, 0.0, 0
  %v1107 = vsel %vm454, %v1044, 0
  %1109 = vmatprep.subr.mxu0 0.0
  %1110 = vmatpush1.msra.mxu0 %v1038
  %1111 = vmatprep.subr.mxu0 0.0
  %1112 = vmatpush1.msra.mxu0 %v1039
  %1113 = vmatprep.subr.mxu0 0.0
  %1114 = vmatpush1.msra.mxu0 %v1040
  %1115 = vmatprep.subr.mxu0 0.0
  %1116 = vmatpush1.msra.mxu0 %v1041
  %1117 = vmatprep.subr.mxu0 0.0
  %1118 = vmatpush1.msra.mxu0 %v1042
  %1119 = vmatprep.subr.mxu0 0.0
  %1120 = vmatpush1.msra.mxu0 %v1043
  %1121 = vmatprep.subr.mxu0 0.0
  %1122 = vmatpush1.msra.mxu0 %v1107
  %1123 = vmatprep.subr.mxu0 0.0
  %1124 = vmatpush1.msra.mxu0 0.0
  %1125 = vmatprep.subr.mxu0 0.0
  %1126 = vmatpush1.msra.mxu0 0.0
  %1127 = vmatprep.subr.mxu0 0.0
  %1128 = vmatpush1.msra.mxu0 0.0
  %1129 = vmatprep.subr.mxu0 0.0
  %1130 = vmatpush1.msra.mxu0 0.0
  %1131 = vmatprep.subr.mxu0 0.0
  %1132 = vmatpush1.msra.mxu0 0.0
  %1133 = vmatprep.subr.mxu0 0.0
  %1134 = vmatpush1.msra.mxu0 0.0
  %1135 = vmatprep.subr.mxu0 0.0
  %1136 = vmatpush1.msra.mxu0 0.0
  %1137 = vmatprep.subr.mxu0 0.0
  %1138 = vmatpush1.msra.mxu0 0.0
  %1139 = vmatprep.subr.mxu0 0.0
  %1140 = vmatpush1.msra.mxu0 0.0
  %1141 = vmatprep.subr.mxu0 0.0
  %1142 = vmatpush1.msra.mxu0 0.0
  %1143 = vmatprep.subr.mxu0 0.0
  %1144 = vmatpush1.msra.mxu0 0.0
  %1145 = vmatprep.subr.mxu0 0.0
  %1146 = vmatpush1.msra.mxu0 0.0
  %1147 = vmatprep.subr.mxu0 0.0
  %1148 = vmatpush1.msra.mxu0 0.0
  %1149 = vmatprep.subr.mxu0 0.0
  %1150 = vmatpush1.msra.mxu0 0.0
  %1151 = vmatprep.subr.mxu0 0.0
  %1152 = vmatpush1.msra.mxu0 0.0
  %1153 = vmatprep.subr.mxu0 0.0
  %1154 = vmatpush1.msra.mxu0 0.0
  %1155 = vmatprep.subr.mxu0 0.0
  %1156 = vmatpush1.msra.mxu0 0.0
  %1157 = vmatprep.subr.mxu0 0.0
  %1158 = vmatpush1.msra.mxu0 0.0
  %1159 = vmatprep.subr.mxu0 0.0
  %1160 = vmatpush1.msra.mxu0 0.0
  %1161 = vmatprep.subr.mxu0 0.0
  %1162 = vmatpush1.msra.mxu0 0.0
  %1163 = vmatprep.subr.mxu0 0.0
  %1164 = vmatpush1.msra.mxu0 0.0
  %1165 = vmatprep.subr.mxu0 0.0
  %1166 = vmatpush1.msra.mxu0 0.0
  %1167 = vmatprep.subr.mxu0 0.0
  %1168 = vmatpush1.msra.mxu0 0.0
  %1169 = vmatprep.subr.mxu0 0.0
  %1170 = vmatpush1.msra.mxu0 0.0
  %1171 = vmatprep.subr.mxu0 0.0
  %1172 = vmatpush1.msra.mxu0 0.0
  %1173 = vmatprep.mubr.f32.mxu0 0.0
  %1174 = vmatmul.mubr.f32.gmra.mrb[0].mxu0 %v1104
  %v1175 = vpop.f32.mrb[0].mxu0
  %v1176 = vadd.f32 %v1100, %v1175
  %v1177 = vpop.f32.mrb[0].mxu0
  %1178 = vmatprep.mubr.f32.mxu0 0.0
  %1179 = vmatmul.mubr.f32.gmra.mrb[0].mxu0 %v1104
  %v1180 = vpop.f32.mrb[0].mxu0
  %v1181 = vadd.f32 %v1100, %v1180
  %v1182 = vpop.f32.mrb[0].mxu0
  %1183 = vdwg.mxu0
  %v1185 = vlaneseq
  %v1186 = vshrl.u32 %v1185, 7
  %v1187 = vsub.s32 0, %v1186
  %v1188 = vrot.slane %v1087, %v1187
  %v1191 = vsel %vm454, %v1052, 0
  %1193 = vmatprep.subr.mxu0 0.0
  %1194 = vmatpush1.msra.mxu0 %v1046
  %1195 = vmatprep.subr.mxu0 0.0
  %1196 = vmatpush1.msra.mxu0 %v1047
  %1197 = vmatprep.subr.mxu0 0.0
  %1198 = vmatpush1.msra.mxu0 %v1048
  %1199 = vmatprep.subr.mxu0 0.0
  %1200 = vmatpush1.msra.mxu0 %v1049
  %1201 = vmatprep.subr.mxu0 0.0
  %1202 = vmatpush1.msra.mxu0 %v1050
  %1203 = vmatprep.subr.mxu0 0.0
  %1204 = vmatpush1.msra.mxu0 %v1051
  %1205 = vmatprep.subr.mxu0 0.0
  %1206 = vmatpush1.msra.mxu0 %v1191
  %1207 = vmatprep.subr.mxu0 0.0
  %1208 = vmatpush1.msra.mxu0 0.0
  %1209 = vmatprep.subr.mxu0 0.0
  %1210 = vmatpush1.msra.mxu0 0.0
  %1211 = vmatprep.subr.mxu0 0.0
  %1212 = vmatpush1.msra.mxu0 0.0
  %1213 = vmatprep.subr.mxu0 0.0
  %1214 = vmatpush1.msra.mxu0 0.0
  %1215 = vmatprep.subr.mxu0 0.0
  %1216 = vmatpush1.msra.mxu0 0.0
  %1217 = vmatprep.subr.mxu0 0.0
  %1218 = vmatpush1.msra.mxu0 0.0
  %1219 = vmatprep.subr.mxu0 0.0
  %1220 = vmatpush1.msra.mxu0 0.0
  %1221 = vmatprep.subr.mxu0 0.0
  %1222 = vmatpush1.msra.mxu0 0.0
  %1223 = vmatprep.subr.mxu0 0.0
  %1224 = vmatpush1.msra.mxu0 0.0
  %1225 = vmatprep.subr.mxu0 0.0
  %1226 = vmatpush1.msra.mxu0 0.0
  %1227 = vmatprep.subr.mxu0 0.0
  %1228 = vmatpush1.msra.mxu0 0.0
  %1229 = vmatprep.subr.mxu0 0.0
  %1230 = vmatpush1.msra.mxu0 0.0
  %1231 = vmatprep.subr.mxu0 0.0
  %1232 = vmatpush1.msra.mxu0 0.0
  %1233 = vmatprep.subr.mxu0 0.0
  %1234 = vmatpush1.msra.mxu0 0.0
  %1235 = vmatprep.subr.mxu0 0.0
  %1236 = vmatpush1.msra.mxu0 0.0
  %1237 = vmatprep.subr.mxu0 0.0
  %1238 = vmatpush1.msra.mxu0 0.0
  %1239 = vmatprep.subr.mxu0 0.0
  %1240 = vmatpush1.msra.mxu0 0.0
  %1241 = vmatprep.subr.mxu0 0.0
  %1242 = vmatpush1.msra.mxu0 0.0
  %1243 = vmatprep.subr.mxu0 0.0
  %1244 = vmatpush1.msra.mxu0 0.0
  %1245 = vmatprep.subr.mxu0 0.0
  %1246 = vmatpush1.msra.mxu0 0.0
  %1247 = vmatprep.subr.mxu0 0.0
  %1248 = vmatpush1.msra.mxu0 0.0
  %1249 = vmatprep.subr.mxu0 0.0
  %1250 = vmatpush1.msra.mxu0 0.0
  %1251 = vmatprep.subr.mxu0 0.0
  %1252 = vmatpush1.msra.mxu0 0.0
  %1253 = vmatprep.subr.mxu0 0.0
  %1254 = vmatpush1.msra.mxu0 0.0
  %1255 = vmatprep.subr.mxu0 0.0
  %1256 = vmatpush1.msra.mxu0 0.0
  %1257 = vmatprep.mubr.f32.mxu0 0.0
  %1258 = vmatmul.mubr.f32.gmra.mrb[0].mxu0 %v1104
  %v1259 = vpop.f32.mrb[0].mxu0
  %v1260 = vadd.f32 %v1188, %v1259
  %v1261 = vpop.f32.mrb[0].mxu0
  %1262 = vmatprep.mubr.f32.mxu0 0.0
  %1263 = vmatmul.mubr.f32.gmra.mrb[0].mxu0 %v1104
  %v1264 = vpop.f32.mrb[0].mxu0
  %v1265 = vadd.f32 %v1188, %v1264
  %v1266 = vpop.f32.mrb[0].mxu0
  %1267 = vdwg.mxu0
  %v1269 = vlaneseq
  %v1270 = vshrl.u32 %v1269, 7
  %v1271 = vsub.s32 0, %v1270
  %v1272 = vrot.slane %v1089, %v1271
  %v1275 = vsel %vm454, %v1060, 0
  %1277 = vmatprep.subr.mxu0 0.0
  %1278 = vmatpush1.msra.mxu0 %v1054
  %1279 = vmatprep.subr.mxu0 0.0
  %1280 = vmatpush1.msra.mxu0 %v1055
  %1281 = vmatprep.subr.mxu0 0.0
  %1282 = vmatpush1.msra.mxu0 %v1056
  %1283 = vmatprep.subr.mxu0 0.0
  %1284 = vmatpush1.msra.mxu0 %v1057
  %1285 = vmatprep.subr.mxu0 0.0
  %1286 = vmatpush1.msra.mxu0 %v1058
  %1287 = vmatprep.subr.mxu0 0.0
  %1288 = vmatpush1.msra.mxu0 %v1059
  %1289 = vmatprep.subr.mxu0 0.0
  %1290 = vmatpush1.msra.mxu0 %v1275
  %1291 = vmatprep.subr.mxu0 0.0
  %1292 = vmatpush1.msra.mxu0 0.0
  %1293 = vmatprep.subr.mxu0 0.0
  %1294 = vmatpush1.msra.mxu0 0.0
  %1295 = vmatprep.subr.mxu0 0.0
  %1296 = vmatpush1.msra.mxu0 0.0
  %1297 = vmatprep.subr.mxu0 0.0
  %1298 = vmatpush1.msra.mxu0 0.0
  %1299 = vmatprep.subr.mxu0 0.0
  %1300 = vmatpush1.msra.mxu0 0.0
  %1301 = vmatprep.subr.mxu0 0.0
  %1302 = vmatpush1.msra.mxu0 0.0
  %1303 = vmatprep.subr.mxu0 0.0
  %1304 = vmatpush1.msra.mxu0 0.0
  %1305 = vmatprep.subr.mxu0 0.0
  %1306 = vmatpush1.msra.mxu0 0.0
  %1307 = vmatprep.subr.mxu0 0.0
  %1308 = vmatpush1.msra.mxu0 0.0
  %1309 = vmatprep.subr.mxu0 0.0
  %1310 = vmatpush1.msra.mxu0 0.0
  %1311 = vmatprep.subr.mxu0 0.0
  %1312 = vmatpush1.msra.mxu0 0.0
  %1313 = vmatprep.subr.mxu0 0.0
  %1314 = vmatpush1.msra.mxu0 0.0
  %1315 = vmatprep.subr.mxu0 0.0
  %1316 = vmatpush1.msra.mxu0 0.0
  %1317 = vmatprep.subr.mxu0 0.0
  %1318 = vmatpush1.msra.mxu0 0.0
  %1319 = vmatprep.subr.mxu0 0.0
  %1320 = vmatpush1.msra.mxu0 0.0
  %1321 = vmatprep.subr.mxu0 0.0
  %1322 = vmatpush1.msra.mxu0 0.0
  %1323 = vmatprep.subr.mxu0 0.0
  %1324 = vmatpush1.msra.mxu0 0.0
  %1325 = vmatprep.subr.mxu0 0.0
  %1326 = vmatpush1.msra.mxu0 0.0
  %1327 = vmatprep.subr.mxu0 0.0
  %1328 = vmatpush1.msra.mxu0 0.0
  %1329 = vmatprep.subr.mxu0 0.0
  %1330 = vmatpush1.msra.mxu0 0.0
  %1331 = vmatprep.subr.mxu0 0.0
  %1332 = vmatpush1.msra.mxu0 0.0
  %1333 = vmatprep.subr.mxu0 0.0
  %1334 = vmatpush1.msra.mxu0 0.0
  %1335 = vmatprep.subr.mxu0 0.0
  %1336 = vmatpush1.msra.mxu0 0.0
  %1337 = vmatprep.subr.mxu0 0.0
  %1338 = vmatpush1.msra.mxu0 0.0
  %1339 = vmatprep.subr.mxu0 0.0
  %1340 = vmatpush1.msra.mxu0 0.0
  %1341 = vmatprep.mubr.f32.mxu0 0.0
  %1342 = vmatmul.mubr.f32.gmra.mrb[0].mxu0 %v1104
  %v1343 = vpop.f32.mrb[0].mxu0
  %v1344 = vadd.f32 %v1272, %v1343
  %v1345 = vpop.f32.mrb[0].mxu0
  %1346 = vmatprep.mubr.f32.mxu0 0.0
  %1347 = vmatmul.mubr.f32.gmra.mrb[0].mxu0 %v1104
  %v1348 = vpop.f32.mrb[0].mxu0
  %v1349 = vadd.f32 %v1272, %v1348
  %v1350 = vpop.f32.mrb[0].mxu0
  %1351 = vdwg.mxu0
  %v1352 = vadd.f32 %v525, %v1176
  %v1353 = vadd.f32 %v530, %v1181
  %v1354 = vxor.u32 %v1352, 2147483648
  %v1355 = vxor.u32 %v1353, 2147483648
  %v1356 = vmul.f32 %v1354, 1.442695
  %v1357 = vpow.pop %v1356
  %v1358 = vmul.f32 %v1355, 1.442695
  %v1359 = vpow.pop %v1358
  %v1360 = vadd.f32 %v1357, 1.0
  %v1361 = vadd.f32 %v1359, 1.0
  %v1362 = vrcp.pop %v1360
  %v1363 = vmul.f32 1.0, %v1362
  %v1364 = vrcp.pop %v1361
  %v1365 = vmul.f32 1.0, %v1364
  %v1366 = vadd.f32 %v624, %v1260
  %v1367 = vadd.f32 %v629, %v1265
  %v1368 = vxor.u32 %v1366, 2147483648
  %v1369 = vxor.u32 %v1367, 2147483648
  %v1370 = vmul.f32 %v1368, 1.442695
  %v1371 = vpow.pop %v1370
  %v1372 = vmul.f32 %v1369, 1.442695
  %v1373 = vpow.pop %v1372
  %v1374 = vadd.f32 %v1371, 1.0
  %v1375 = vadd.f32 %v1373, 1.0
  %v1376 = vrcp.pop %v1374
  %v1377 = vmul.f32 1.0, %v1376
  %v1378 = vrcp.pop %v1375
  %v1379 = vmul.f32 1.0, %v1378
  %v1380 = vmul.f32 %v1363, %v1344
  %v1381 = vmul.f32 %v1365, %v1349
  %v1382 = vadd.f32 %v723, %v1380
  %v1383 = vadd.f32 %v728, %v1381
  %v1384 = vtanh.pop %v1382
  %v1385 = vtanh.pop %v1383
  %v1386 = vsub.f32 1.0, %v1377
  %v1387 = vsub.f32 1.0, %v1379
  %v1388 = vmul.f32 %v1386, %v1384
  %v1389 = vmul.f32 %v1387, %v1385
  %v1390 = vmul.f32 %v1377, 0.0
  %v1391 = vmul.f32 %v1379, 0.0
  %v1392 = vadd.f32 %v1388, %v1390
  %v1393 = vadd.f32 %v1389, %v1391
  %v1395 = vlaneseq
  %v1396 = vshrl.u32 %v1395, 7
  %v1397 = vsub.s32 0, %v1396
  %v1398 = vrot.slane %v1091, %v1397
  %v1401 = vsel %vm454, %v1068, 0
  %1403 = vmatprep.subr.mxu0 0.0
  %1404 = vmatpush1.msra.mxu0 %v1062
  %1405 = vmatprep.subr.mxu0 0.0
  %1406 = vmatpush1.msra.mxu0 %v1063
  %1407 = vmatprep.subr.mxu0 0.0
  %1408 = vmatpush1.msra.mxu0 %v1064
  %1409 = vmatprep.subr.mxu0 0.0
  %1410 = vmatpush1.msra.mxu0 %v1065
  %1411 = vmatprep.subr.mxu0 0.0
  %1412 = vmatpush1.msra.mxu0 %v1066
  %1413 = vmatprep.subr.mxu0 0.0
  %1414 = vmatpush1.msra.mxu0 %v1067
  %1415 = vmatprep.subr.mxu0 0.0
  %1416 = vmatpush1.msra.mxu0 %v1401
  %1417 = vmatprep.subr.mxu0 0.0
  %1418 = vmatpush1.msra.mxu0 0.0
  %1419 = vmatprep.subr.mxu0 0.0
  %1420 = vmatpush1.msra.mxu0 0.0
  %1421 = vmatprep.subr.mxu0 0.0
  %1422 = vmatpush1.msra.mxu0 0.0
  %1423 = vmatprep.subr.mxu0 0.0
  %1424 = vmatpush1.msra.mxu0 0.0
  %1425 = vmatprep.subr.mxu0 0.0
  %1426 = vmatpush1.msra.mxu0 0.0
  %1427 = vmatprep.subr.mxu0 0.0
  %1428 = vmatpush1.msra.mxu0 0.0
  %1429 = vmatprep.subr.mxu0 0.0
  %1430 = vmatpush1.msra.mxu0 0.0
  %1431 = vmatprep.subr.mxu0 0.0
  %1432 = vmatpush1.msra.mxu0 0.0
  %1433 = vmatprep.subr.mxu0 0.0
  %1434 = vmatpush1.msra.mxu0 0.0
  %1435 = vmatprep.subr.mxu0 0.0
  %1436 = vmatpush1.msra.mxu0 0.0
  %1437 = vmatprep.subr.mxu0 0.0
  %1438 = vmatpush1.msra.mxu0 0.0
  %1439 = vmatprep.subr.mxu0 0.0
  %1440 = vmatpush1.msra.mxu0 0.0
  %1441 = vmatprep.subr.mxu0 0.0
  %1442 = vmatpush1.msra.mxu0 0.0
  %1443 = vmatprep.subr.mxu0 0.0
  %1444 = vmatpush1.msra.mxu0 0.0
  %1445 = vmatprep.subr.mxu0 0.0
  %1446 = vmatpush1.msra.mxu0 0.0
  %1447 = vmatprep.subr.mxu0 0.0
  %1448 = vmatpush1.msra.mxu0 0.0
  %1449 = vmatprep.subr.mxu0 0.0
  %1450 = vmatpush1.msra.mxu0 0.0
  %1451 = vmatprep.subr.mxu0 0.0
  %1452 = vmatpush1.msra.mxu0 0.0
  %1453 = vmatprep.subr.mxu0 0.0
  %1454 = vmatpush1.msra.mxu0 0.0
  %1455 = vmatprep.subr.mxu0 0.0
  %1456 = vmatpush1.msra.mxu0 0.0
  %1457 = vmatprep.subr.mxu0 0.0
  %1458 = vmatpush1.msra.mxu0 0.0
  %1459 = vmatprep.subr.mxu0 0.0
  %1460 = vmatpush1.msra.mxu0 0.0
  %1461 = vmatprep.subr.mxu0 0.0
  %1462 = vmatpush1.msra.mxu0 0.0
  %1463 = vmatprep.subr.mxu0 0.0
  %1464 = vmatpush1.msra.mxu0 0.0
  %1465 = vmatprep.subr.mxu0 0.0
  %1466 = vmatpush1.msra.mxu0 0.0
  %1467 = vmatprep.mubr.f32.mxu0 0.0
  %1468 = vmatmul.mubr.f32.gmra.mrb[0].mxu0 %v1104
  %v1469 = vpop.f32.mrb[0].mxu0
  %v1470 = vadd.f32 %v1398, %v1469
  %v1471 = vpop.f32.mrb[0].mxu0
  %1472 = vmatprep.mubr.f32.mxu0 0.0
  %1473 = vmatmul.mubr.f32.gmra.mrb[0].mxu0 %v1104
  %v1474 = vpop.f32.mrb[0].mxu0
  %v1475 = vadd.f32 %v1398, %v1474
  %v1476 = vpop.f32.mrb[0].mxu0
  %1477 = vdwg.mxu0
  %v1479 = vlaneseq
  %v1480 = vshrl.u32 %v1479, 7
  %v1481 = vsub.s32 0, %v1480
  %v1482 = vrot.slane %v1093, %v1481
  %v1485 = vsel %vm454, %v1076, 0
  %1487 = vmatprep.subr.mxu0 0.0
  %1488 = vmatpush1.msra.mxu0 %v1070
  %1489 = vmatprep.subr.mxu0 0.0
  %1490 = vmatpush1.msra.mxu0 %v1071
  %1491 = vmatprep.subr.mxu0 0.0
  %1492 = vmatpush1.msra.mxu0 %v1072
  %1493 = vmatprep.subr.mxu0 0.0
  %1494 = vmatpush1.msra.mxu0 %v1073
  %1495 = vmatprep.subr.mxu0 0.0
  %1496 = vmatpush1.msra.mxu0 %v1074
  %1497 = vmatprep.subr.mxu0 0.0
  %1498 = vmatpush1.msra.mxu0 %v1075
  %1499 = vmatprep.subr.mxu0 0.0
  %1500 = vmatpush1.msra.mxu0 %v1485
  %1501 = vmatprep.subr.mxu0 0.0
  %1502 = vmatpush1.msra.mxu0 0.0
  %1503 = vmatprep.subr.mxu0 0.0
  %1504 = vmatpush1.msra.mxu0 0.0
  %1505 = vmatprep.subr.mxu0 0.0
  %1506 = vmatpush1.msra.mxu0 0.0
  %1507 = vmatprep.subr.mxu0 0.0
  %1508 = vmatpush1.msra.mxu0 0.0
  %1509 = vmatprep.subr.mxu0 0.0
  %1510 = vmatpush1.msra.mxu0 0.0
  %1511 = vmatprep.subr.mxu0 0.0
  %1512 = vmatpush1.msra.mxu0 0.0
  %1513 = vmatprep.subr.mxu0 0.0
  %1514 = vmatpush1.msra.mxu0 0.0
  %1515 = vmatprep.subr.mxu0 0.0
  %1516 = vmatpush1.msra.mxu0 0.0
  %1517 = vmatprep.subr.mxu0 0.0
  %1518 = vmatpush1.msra.mxu0 0.0
  %1519 = vmatprep.subr.mxu0 0.0
  %1520 = vmatpush1.msra.mxu0 0.0
  %1521 = vmatprep.subr.mxu0 0.0
  %1522 = vmatpush1.msra.mxu0 0.0
  %1523 = vmatprep.subr.mxu0 0.0
  %1524 = vmatpush1.msra.mxu0 0.0
  %1525 = vmatprep.subr.mxu0 0.0
  %1526 = vmatpush1.msra.mxu0 0.0
  %1527 = vmatprep.subr.mxu0 0.0
  %1528 = vmatpush1.msra.mxu0 0.0
  %1529 = vmatprep.subr.mxu0 0.0
  %1530 = vmatpush1.msra.mxu0 0.0
  %1531 = vmatprep.subr.mxu0 0.0
  %1532 = vmatpush1.msra.mxu0 0.0
  %1533 = vmatprep.subr.mxu0 0.0
  %1534 = vmatpush1.msra.mxu0 0.0
  %1535 = vmatprep.subr.mxu0 0.0
  %1536 = vmatpush1.msra.mxu0 0.0
  %1537 = vmatprep.subr.mxu0 0.0
  %1538 = vmatpush1.msra.mxu0 0.0
  %1539 = vmatprep.subr.mxu0 0.0
  %1540 = vmatpush1.msra.mxu0 0.0
  %1541 = vmatprep.subr.mxu0 0.0
  %1542 = vmatpush1.msra.mxu0 0.0
  %1543 = vmatprep.subr.mxu0 0.0
  %1544 = vmatpush1.msra.mxu0 0.0
  %1545 = vmatprep.subr.mxu0 0.0
  %1546 = vmatpush1.msra.mxu0 0.0
  %1547 = vmatprep.subr.mxu0 0.0
  %1548 = vmatpush1.msra.mxu0 0.0
  %1549 = vmatprep.subr.mxu0 0.0
  %1550 = vmatpush1.msra.mxu0 0.0
  %1551 = vmatprep.mubr.f32.mxu0 0.0
  %1552 = vmatmul.mubr.f32.gmra.mrb[0].mxu0 %v1104
  %v1553 = vpop.f32.mrb[0].mxu0
  %v1554 = vadd.f32 %v1482, %v1553
  %v1555 = vpop.f32.mrb[0].mxu0
  %1556 = vmatprep.mubr.f32.mxu0 0.0
  %1557 = vmatmul.mubr.f32.gmra.mrb[0].mxu0 %v1104
  %v1558 = vpop.f32.mrb[0].mxu0
  %v1559 = vadd.f32 %v1482, %v1558
  %v1560 = vpop.f32.mrb[0].mxu0
  %1561 = vdwg.mxu0
  %v1563 = vlaneseq
  %v1564 = vshrl.u32 %v1563, 7
  %v1565 = vsub.s32 0, %v1564
  %v1566 = vrot.slane %v1095, %v1565
  %v1569 = vsel %vm454, %v1084, 0
  %1571 = vmatprep.subr.mxu0 0.0
  %1572 = vmatpush1.msra.mxu0 %v1078
  %1573 = vmatprep.subr.mxu0 0.0
  %1574 = vmatpush1.msra.mxu0 %v1079
  %1575 = vmatprep.subr.mxu0 0.0
  %1576 = vmatpush1.msra.mxu0 %v1080
  %1577 = vmatprep.subr.mxu0 0.0
  %1578 = vmatpush1.msra.mxu0 %v1081
  %1579 = vmatprep.subr.mxu0 0.0
  %1580 = vmatpush1.msra.mxu0 %v1082
  %1581 = vmatprep.subr.mxu0 0.0
  %1582 = vmatpush1.msra.mxu0 %v1083
  %1583 = vmatprep.subr.mxu0 0.0
  %1584 = vmatpush1.msra.mxu0 %v1569
  %1585 = vmatprep.subr.mxu0 0.0
  %1586 = vmatpush1.msra.mxu0 0.0
  %1587 = vmatprep.subr.mxu0 0.0
  %1588 = vmatpush1.msra.mxu0 0.0
  %1589 = vmatprep.subr.mxu0 0.0
  %1590 = vmatpush1.msra.mxu0 0.0
  %1591 = vmatprep.subr.mxu0 0.0
  %1592 = vmatpush1.msra.mxu0 0.0
  %1593 = vmatprep.subr.mxu0 0.0
  %1594 = vmatpush1.msra.mxu0 0.0
  %1595 = vmatprep.subr.mxu0 0.0
  %1596 = vmatpush1.msra.mxu0 0.0
  %1597 = vmatprep.subr.mxu0 0.0
  %1598 = vmatpush1.msra.mxu0 0.0
  %1599 = vmatprep.subr.mxu0 0.0
  %1600 = vmatpush1.msra.mxu0 0.0
  %1601 = vmatprep.subr.mxu0 0.0
  %1602 = vmatpush1.msra.mxu0 0.0
  %1603 = vmatprep.subr.mxu0 0.0
  %1604 = vmatpush1.msra.mxu0 0.0
  %1605 = vmatprep.subr.mxu0 0.0
  %1606 = vmatpush1.msra.mxu0 0.0
  %1607 = vmatprep.subr.mxu0 0.0
  %1608 = vmatpush1.msra.mxu0 0.0
  %1609 = vmatprep.subr.mxu0 0.0
  %1610 = vmatpush1.msra.mxu0 0.0
  %1611 = vmatprep.subr.mxu0 0.0
  %1612 = vmatpush1.msra.mxu0 0.0
  %1613 = vmatprep.subr.mxu0 0.0
  %1614 = vmatpush1.msra.mxu0 0.0
  %1615 = vmatprep.subr.mxu0 0.0
  %1616 = vmatpush1.msra.mxu0 0.0
  %1617 = vmatprep.subr.mxu0 0.0
  %1618 = vmatpush1.msra.mxu0 0.0
  %1619 = vmatprep.subr.mxu0 0.0
  %1620 = vmatpush1.msra.mxu0 0.0
  %1621 = vmatprep.subr.mxu0 0.0
  %1622 = vmatpush1.msra.mxu0 0.0
  %1623 = vmatprep.subr.mxu0 0.0
  %1624 = vmatpush1.msra.mxu0 0.0
  %1625 = vmatprep.subr.mxu0 0.0
  %1626 = vmatpush1.msra.mxu0 0.0
  %1627 = vmatprep.subr.mxu0 0.0
  %1628 = vmatpush1.msra.mxu0 0.0
  %1629 = vmatprep.subr.mxu0 0.0
  %1630 = vmatpush1.msra.mxu0 0.0
  %1631 = vmatprep.subr.mxu0 0.0
  %1632 = vmatpush1.msra.mxu0 0.0
  %1633 = vmatprep.subr.mxu0 0.0
  %1634 = vmatpush1.msra.mxu0 0.0
  %1635 = vmatprep.mubr.f32.mxu0 0.0
  %1636 = vmatmul.mubr.f32.gmra.mrb[0].mxu0 %v1104
  %v1637 = vpop.f32.mrb[0].mxu0
  %v1638 = vadd.f32 %v1566, %v1637
  %v1639 = vpop.f32.mrb[0].mxu0
  %1640 = vmatprep.mubr.f32.mxu0 0.0
  %1641 = vmatmul.mubr.f32.gmra.mrb[0].mxu0 %v1104
  %v1642 = vpop.f32.mrb[0].mxu0
  %v1643 = vadd.f32 %v1566, %v1642
  %v1644 = vpop.f32.mrb[0].mxu0
  %1645 = vdwg.mxu0
  %v1646 = vadd.f32 %v832, %v1470
  %v1647 = vadd.f32 %v837, %v1475
  %v1648 = vxor.u32 %v1646, 2147483648
  %v1649 = vxor.u32 %v1647, 2147483648
  %v1650 = vmul.f32 %v1648, 1.442695
  %v1651 = vpow.pop %v1650
  %v1652 = vmul.f32 %v1649, 1.442695
  %v1653 = vpow.pop %v1652
  %v1654 = vadd.f32 %v1651, 1.0
  %v1655 = vadd.f32 %v1653, 1.0
  %v1656 = vrcp.pop %v1654
  %v1657 = vmul.f32 1.0, %v1656
  %v1658 = vrcp.pop %v1655
  %v1659 = vmul.f32 1.0, %v1658
  %v1660 = vadd.f32 %v931, %v1554
  %v1661 = vadd.f32 %v936, %v1559
  %v1662 = vxor.u32 %v1660, 2147483648
  %v1663 = vxor.u32 %v1661, 2147483648
  %v1664 = vmul.f32 %v1662, 1.442695
  %v1665 = vpow.pop %v1664
  %v1666 = vmul.f32 %v1663, 1.442695
  %v1667 = vpow.pop %v1666
  %v1668 = vadd.f32 %v1665, 1.0
  %v1669 = vadd.f32 %v1667, 1.0
  %v1670 = vrcp.pop %v1668
  %v1671 = vmul.f32 1.0, %v1670
  %v1672 = vrcp.pop %v1669
  %v1673 = vmul.f32 1.0, %v1672
  %v1674 = vmul.f32 %v1657, %v1638
  %v1675 = vmul.f32 %v1659, %v1643
  %v1676 = vadd.f32 %v1030, %v1674
  %v1677 = vadd.f32 %v1035, %v1675
  %v1678 = vtanh.pop %v1676
  %v1679 = vtanh.pop %v1677
  %v1680 = vsub.f32 1.0, %v1671
  %v1681 = vsub.f32 1.0, %v1673
  %v1682 = vmul.f32 %v1680, %v1678
  %v1683 = vmul.f32 %v1681, %v1679
  %v1684 = vmul.f32 %v1671, 0.0
  %v1685 = vmul.f32 %v1673, 0.0
  %v1686 = vadd.f32 %v1682, %v1684
  %v1687 = vadd.f32 %v1683, %v1685
  %v1689 = vsel %vm1102, %v1392, 0
  %v1692 = vsel %vm1102, %v1393, 0
  %1694 = vmatprep.subr.mxu0 0.0
  %1695 = vmatpush1.msra.mxu0 %v1038
  %1696 = vmatprep.subr.mxu0 0.0
  %1697 = vmatpush1.msra.mxu0 %v1039
  %1698 = vmatprep.subr.mxu0 0.0
  %1699 = vmatpush1.msra.mxu0 %v1040
  %1700 = vmatprep.subr.mxu0 0.0
  %1701 = vmatpush1.msra.mxu0 %v1041
  %1702 = vmatprep.subr.mxu0 0.0
  %1703 = vmatpush1.msra.mxu0 %v1042
  %1704 = vmatprep.subr.mxu0 0.0
  %1705 = vmatpush1.msra.mxu0 %v1043
  %1706 = vmatprep.subr.mxu0 0.0
  %1707 = vmatpush1.msra.mxu0 %v1107
  %1708 = vmatprep.subr.mxu0 0.0
  %1709 = vmatpush1.msra.mxu0 0.0
  %1710 = vmatprep.subr.mxu0 0.0
  %1711 = vmatpush1.msra.mxu0 0.0
  %1712 = vmatprep.subr.mxu0 0.0
  %1713 = vmatpush1.msra.mxu0 0.0
  %1714 = vmatprep.subr.mxu0 0.0
  %1715 = vmatpush1.msra.mxu0 0.0
  %1716 = vmatprep.subr.mxu0 0.0
  %1717 = vmatpush1.msra.mxu0 0.0
  %1718 = vmatprep.subr.mxu0 0.0
  %1719 = vmatpush1.msra.mxu0 0.0
  %1720 = vmatprep.subr.mxu0 0.0
  %1721 = vmatpush1.msra.mxu0 0.0
  %1722 = vmatprep.subr.mxu0 0.0
  %1723 = vmatpush1.msra.mxu0 0.0
  %1724 = vmatprep.subr.mxu0 0.0
  %1725 = vmatpush1.msra.mxu0 0.0
  %1726 = vmatprep.subr.mxu0 0.0
  %1727 = vmatpush1.msra.mxu0 0.0
  %1728 = vmatprep.subr.mxu0 0.0
  %1729 = vmatpush1.msra.mxu0 0.0
  %1730 = vmatprep.subr.mxu0 0.0
  %1731 = vmatpush1.msra.mxu0 0.0
  %1732 = vmatprep.subr.mxu0 0.0
  %1733 = vmatpush1.msra.mxu0 0.0
  %1734 = vmatprep.subr.mxu0 0.0
  %1735 = vmatpush1.msra.mxu0 0.0
  %1736 = vmatprep.subr.mxu0 0.0
  %1737 = vmatpush1.msra.mxu0 0.0
  %1738 = vmatprep.subr.mxu0 0.0
  %1739 = vmatpush1.msra.mxu0 0.0
  %1740 = vmatprep.subr.mxu0 0.0
  %1741 = vmatpush1.msra.mxu0 0.0
  %1742 = vmatprep.subr.mxu0 0.0
  %1743 = vmatpush1.msra.mxu0 0.0
  %1744 = vmatprep.subr.mxu0 0.0
  %1745 = vmatpush1.msra.mxu0 0.0
  %1746 = vmatprep.subr.mxu0 0.0
  %1747 = vmatpush1.msra.mxu0 0.0
  %1748 = vmatprep.subr.mxu0 0.0
  %1749 = vmatpush1.msra.mxu0 0.0
  %1750 = vmatprep.subr.mxu0 0.0
  %1751 = vmatpush1.msra.mxu0 0.0
  %1752 = vmatprep.subr.mxu0 0.0
  %1753 = vmatpush1.msra.mxu0 0.0
  %1754 = vmatprep.subr.mxu0 0.0
  %1755 = vmatpush1.msra.mxu0 0.0
  %1756 = vmatprep.subr.mxu0 0.0
  %1757 = vmatpush1.msra.mxu0 0.0
  %1758 = vmatprep.mubr.f32.mxu0 0.0
  %1759 = vmatmul.mubr.f32.gmra.mrb[0].mxu0 %v1689
  %v1760 = vpop.f32.mrb[0].mxu0
  %v1761 = vadd.f32 %v1100, %v1760
  %v1762 = vpop.f32.mrb[0].mxu0
  %1763 = vmatprep.mubr.f32.mxu0 0.0
  %1764 = vmatmul.mubr.f32.gmra.mrb[0].mxu0 %v1692
  %v1765 = vpop.f32.mrb[0].mxu0
  %v1766 = vadd.f32 %v1100, %v1765
  %v1767 = vpop.f32.mrb[0].mxu0
  %1768 = vdwg.mxu0
  %1769 = vmatprep.subr.mxu0 0.0
  %1770 = vmatpush1.msra.mxu0 %v1046
  %1771 = vmatprep.subr.mxu0 0.0
  %1772 = vmatpush1.msra.mxu0 %v1047
  %1773 = vmatprep.subr.mxu0 0.0
  %1774 = vmatpush1.msra.mxu0 %v1048
  %1775 = vmatprep.subr.mxu0 0.0
  %1776 = vmatpush1.msra.mxu0 %v1049
  %1777 = vmatprep.subr.mxu0 0.0
  %1778 = vmatpush1.msra.mxu0 %v1050
  %1779 = vmatprep.subr.mxu0 0.0
  %1780 = vmatpush1.msra.mxu0 %v1051
  %1781 = vmatprep.subr.mxu0 0.0
  %1782 = vmatpush1.msra.mxu0 %v1191
  %1783 = vmatprep.subr.mxu0 0.0
  %1784 = vmatpush1.msra.mxu0 0.0
  %1785 = vmatprep.subr.mxu0 0.0
  %1786 = vmatpush1.msra.mxu0 0.0
  %1787 = vmatprep.subr.mxu0 0.0
  %1788 = vmatpush1.msra.mxu0 0.0
  %1789 = vmatprep.subr.mxu0 0.0
  %1790 = vmatpush1.msra.mxu0 0.0
  %1791 = vmatprep.subr.mxu0 0.0
  %1792 = vmatpush1.msra.mxu0 0.0
  %1793 = vmatprep.subr.mxu0 0.0
  %1794 = vmatpush1.msra.mxu0 0.0
  %1795 = vmatprep.subr.mxu0 0.0
  %1796 = vmatpush1.msra.mxu0 0.0
  %1797 = vmatprep.subr.mxu0 0.0
  %1798 = vmatpush1.msra.mxu0 0.0
  %1799 = vmatprep.subr.mxu0 0.0
  %1800 = vmatpush1.msra.mxu0 0.0
  %1801 = vmatprep.subr.mxu0 0.0
  %1802 = vmatpush1.msra.mxu0 0.0
  %1803 = vmatprep.subr.mxu0 0.0
  %1804 = vmatpush1.msra.mxu0 0.0
  %1805 = vmatprep.subr.mxu0 0.0
  %1806 = vmatpush1.msra.mxu0 0.0
  %1807 = vmatprep.subr.mxu0 0.0
  %1808 = vmatpush1.msra.mxu0 0.0
  %1809 = vmatprep.subr.mxu0 0.0
  %1810 = vmatpush1.msra.mxu0 0.0
  %1811 = vmatprep.subr.mxu0 0.0
  %1812 = vmatpush1.msra.mxu0 0.0
  %1813 = vmatprep.subr.mxu0 0.0
  %1814 = vmatpush1.msra.mxu0 0.0
  %1815 = vmatprep.subr.mxu0 0.0
  %1816 = vmatpush1.msra.mxu0 0.0
  %1817 = vmatprep.subr.mxu0 0.0
  %1818 = vmatpush1.msra.mxu0 0.0
  %1819 = vmatprep.subr.mxu0 0.0
  %1820 = vmatpush1.msra.mxu0 0.0
  %1821 = vmatprep.subr.mxu0 0.0
  %1822 = vmatpush1.msra.mxu0 0.0
  %1823 = vmatprep.subr.mxu0 0.0
  %1824 = vmatpush1.msra.mxu0 0.0
  %1825 = vmatprep.subr.mxu0 0.0
  %1826 = vmatpush1.msra.mxu0 0.0
  %1827 = vmatprep.subr.mxu0 0.0
  %1828 = vmatpush1.msra.mxu0 0.0
  %1829 = vmatprep.subr.mxu0 0.0
  %1830 = vmatpush1.msra.mxu0 0.0
  %1831 = vmatprep.subr.mxu0 0.0
  %1832 = vmatpush1.msra.mxu0 0.0
  %1833 = vmatprep.mubr.f32.mxu0 0.0
  %1834 = vmatmul.mubr.f32.gmra.mrb[0].mxu0 %v1689
  %v1835 = vpop.f32.mrb[0].mxu0
  %v1836 = vadd.f32 %v1188, %v1835
  %v1837 = vpop.f32.mrb[0].mxu0
  %1838 = vmatprep.mubr.f32.mxu0 0.0
  %1839 = vmatmul.mubr.f32.gmra.mrb[0].mxu0 %v1692
  %v1840 = vpop.f32.mrb[0].mxu0
  %v1841 = vadd.f32 %v1188, %v1840
  %v1842 = vpop.f32.mrb[0].mxu0
  %1843 = vdwg.mxu0
  %1844 = vmatprep.subr.mxu0 0.0
  %1845 = vmatpush1.msra.mxu0 %v1054
  %1846 = vmatprep.subr.mxu0 0.0
  %1847 = vmatpush1.msra.mxu0 %v1055
  %1848 = vmatprep.subr.mxu0 0.0
  %1849 = vmatpush1.msra.mxu0 %v1056
  %1850 = vmatprep.subr.mxu0 0.0
  %1851 = vmatpush1.msra.mxu0 %v1057
  %1852 = vmatprep.subr.mxu0 0.0
  %1853 = vmatpush1.msra.mxu0 %v1058
  %1854 = vmatprep.subr.mxu0 0.0
  %1855 = vmatpush1.msra.mxu0 %v1059
  %1856 = vmatprep.subr.mxu0 0.0
  %1857 = vmatpush1.msra.mxu0 %v1275
  %1858 = vmatprep.subr.mxu0 0.0
  %1859 = vmatpush1.msra.mxu0 0.0
  %1860 = vmatprep.subr.mxu0 0.0
  %1861 = vmatpush1.msra.mxu0 0.0
  %1862 = vmatprep.subr.mxu0 0.0
  %1863 = vmatpush1.msra.mxu0 0.0
  %1864 = vmatprep.subr.mxu0 0.0
  %1865 = vmatpush1.msra.mxu0 0.0
  %1866 = vmatprep.subr.mxu0 0.0
  %1867 = vmatpush1.msra.mxu0 0.0
  %1868 = vmatprep.subr.mxu0 0.0
  %1869 = vmatpush1.msra.mxu0 0.0
  %1870 = vmatprep.subr.mxu0 0.0
  %1871 = vmatpush1.msra.mxu0 0.0
  %1872 = vmatprep.subr.mxu0 0.0
  %1873 = vmatpush1.msra.mxu0 0.0
  %1874 = vmatprep.subr.mxu0 0.0
  %1875 = vmatpush1.msra.mxu0 0.0
  %1876 = vmatprep.subr.mxu0 0.0
  %1877 = vmatpush1.msra.mxu0 0.0
  %1878 = vmatprep.subr.mxu0 0.0
  %1879 = vmatpush1.msra.mxu0 0.0
  %1880 = vmatprep.subr.mxu0 0.0
  %1881 = vmatpush1.msra.mxu0 0.0
  %1882 = vmatprep.subr.mxu0 0.0
  %1883 = vmatpush1.msra.mxu0 0.0
  %1884 = vmatprep.subr.mxu0 0.0
  %1885 = vmatpush1.msra.mxu0 0.0
  %1886 = vmatprep.subr.mxu0 0.0
  %1887 = vmatpush1.msra.mxu0 0.0
  %1888 = vmatprep.subr.mxu0 0.0
  %1889 = vmatpush1.msra.mxu0 0.0
  %1890 = vmatprep.subr.mxu0 0.0
  %1891 = vmatpush1.msra.mxu0 0.0
  %1892 = vmatprep.subr.mxu0 0.0
  %1893 = vmatpush1.msra.mxu0 0.0
  %1894 = vmatprep.subr.mxu0 0.0
  %1895 = vmatpush1.msra.mxu0 0.0
  %1896 = vmatprep.subr.mxu0 0.0
  %1897 = vmatpush1.msra.mxu0 0.0
  %1898 = vmatprep.subr.mxu0 0.0
  %1899 = vmatpush1.msra.mxu0 0.0
  %1900 = vmatprep.subr.mxu0 0.0
  %1901 = vmatpush1.msra.mxu0 0.0
  %1902 = vmatprep.subr.mxu0 0.0
  %1903 = vmatpush1.msra.mxu0 0.0
  %1904 = vmatprep.subr.mxu0 0.0
  %1905 = vmatpush1.msra.mxu0 0.0
  %1906 = vmatprep.subr.mxu0 0.0
  %1907 = vmatpush1.msra.mxu0 0.0
  %1908 = vmatprep.mubr.f32.mxu0 0.0
  %1909 = vmatmul.mubr.f32.gmra.mrb[0].mxu0 %v1689
  %v1910 = vpop.f32.mrb[0].mxu0
  %v1911 = vadd.f32 %v1272, %v1910
  %v1912 = vpop.f32.mrb[0].mxu0
  %1913 = vmatprep.mubr.f32.mxu0 0.0
  %1914 = vmatmul.mubr.f32.gmra.mrb[0].mxu0 %v1692
  %v1915 = vpop.f32.mrb[0].mxu0
  %v1916 = vadd.f32 %v1272, %v1915
  %v1917 = vpop.f32.mrb[0].mxu0
  %1918 = vdwg.mxu0
  %v1919 = vadd.f32 %v535, %v1761
  %v1920 = vadd.f32 %v540, %v1766
  %v1921 = vxor.u32 %v1919, 2147483648
  %v1922 = vxor.u32 %v1920, 2147483648
  %v1923 = vmul.f32 %v1921, 1.442695
  %v1924 = vpow.pop %v1923
  %v1925 = vmul.f32 %v1922, 1.442695
  %v1926 = vpow.pop %v1925
  %v1927 = vadd.f32 %v1924, 1.0
  %v1928 = vadd.f32 %v1926, 1.0
  %v1929 = vrcp.pop %v1927
  %v1930 = vmul.f32 1.0, %v1929
  %v1931 = vrcp.pop %v1928
  %v1932 = vmul.f32 1.0, %v1931
  %v1933 = vadd.f32 %v634, %v1836
  %v1934 = vadd.f32 %v639, %v1841
  %v1935 = vxor.u32 %v1933, 2147483648
  %v1936 = vxor.u32 %v1934, 2147483648
  %v1937 = vmul.f32 %v1935, 1.442695
  %v1938 = vpow.pop %v1937
  %v1939 = vmul.f32 %v1936, 1.442695
  %v1940 = vpow.pop %v1939
  %v1941 = vadd.f32 %v1938, 1.0
  %v1942 = vadd.f32 %v1940, 1.0
  %v1943 = vrcp.pop %v1941
  %v1944 = vmul.f32 1.0, %v1943
  %v1945 = vrcp.pop %v1942
  %v1946 = vmul.f32 1.0, %v1945
  %v1947 = vmul.f32 %v1930, %v1911
  %v1948 = vmul.f32 %v1932, %v1916
  %v1949 = vadd.f32 %v733, %v1947
  %v1950 = vadd.f32 %v738, %v1948
  %v1951 = vtanh.pop %v1949
  %v1952 = vtanh.pop %v1950
  %v1953 = vsub.f32 1.0, %v1944
  %v1954 = vsub.f32 1.0, %v1946
  %v1955 = vmul.f32 %v1953, %v1951
  %v1956 = vmul.f32 %v1954, %v1952
  %v1957 = vmul.f32 %v1944, %v1392
  %v1958 = vmul.f32 %v1946, %v1393
  %v1959 = vadd.f32 %v1955, %v1957
  %v1960 = vadd.f32 %v1956, %v1958
  %v1962 = vsel %vm1102, %v1686, 0
  %v1965 = vsel %vm1102, %v1687, 0
  %1967 = vmatprep.subr.mxu0 0.0
  %1968 = vmatpush1.msra.mxu0 %v1062
  %1969 = vmatprep.subr.mxu0 0.0
  %1970 = vmatpush1.msra.mxu0 %v1063
  %1971 = vmatprep.subr.mxu0 0.0
  %1972 = vmatpush1.msra.mxu0 %v1064
  %1973 = vmatprep.subr.mxu0 0.0
  %1974 = vmatpush1.msra.mxu0 %v1065
  %1975 = vmatprep.subr.mxu0 0.0
  %1976 = vmatpush1.msra.mxu0 %v1066
  %1977 = vmatprep.subr.mxu0 0.0
  %1978 = vmatpush1.msra.mxu0 %v1067
  %1979 = vmatprep.subr.mxu0 0.0
  %1980 = vmatpush1.msra.mxu0 %v1401
  %1981 = vmatprep.subr.mxu0 0.0
  %1982 = vmatpush1.msra.mxu0 0.0
  %1983 = vmatprep.subr.mxu0 0.0
  %1984 = vmatpush1.msra.mxu0 0.0
  %1985 = vmatprep.subr.mxu0 0.0
  %1986 = vmatpush1.msra.mxu0 0.0
  %1987 = vmatprep.subr.mxu0 0.0
  %1988 = vmatpush1.msra.mxu0 0.0
  %1989 = vmatprep.subr.mxu0 0.0
  %1990 = vmatpush1.msra.mxu0 0.0
  %1991 = vmatprep.subr.mxu0 0.0
  %1992 = vmatpush1.msra.mxu0 0.0
  %1993 = vmatprep.subr.mxu0 0.0
  %1994 = vmatpush1.msra.mxu0 0.0
  %1995 = vmatprep.subr.mxu0 0.0
  %1996 = vmatpush1.msra.mxu0 0.0
  %1997 = vmatprep.subr.mxu0 0.0
  %1998 = vmatpush1.msra.mxu0 0.0
  %1999 = vmatprep.subr.mxu0 0.0
  %2000 = vmatpush1.msra.mxu0 0.0
  %2001 = vmatprep.subr.mxu0 0.0
  %2002 = vmatpush1.msra.mxu0 0.0
  %2003 = vmatprep.subr.mxu0 0.0
  %2004 = vmatpush1.msra.mxu0 0.0
  %2005 = vmatprep.subr.mxu0 0.0
  %2006 = vmatpush1.msra.mxu0 0.0
  %2007 = vmatprep.subr.mxu0 0.0
  %2008 = vmatpush1.msra.mxu0 0.0
  %2009 = vmatprep.subr.mxu0 0.0
  %2010 = vmatpush1.msra.mxu0 0.0
  %2011 = vmatprep.subr.mxu0 0.0
  %2012 = vmatpush1.msra.mxu0 0.0
  %2013 = vmatprep.subr.mxu0 0.0
  %2014 = vmatpush1.msra.mxu0 0.0
  %2015 = vmatprep.subr.mxu0 0.0
  %2016 = vmatpush1.msra.mxu0 0.0
  %2017 = vmatprep.subr.mxu0 0.0
  %2018 = vmatpush1.msra.mxu0 0.0
  %2019 = vmatprep.subr.mxu0 0.0
  %2020 = vmatpush1.msra.mxu0 0.0
  %2021 = vmatprep.subr.mxu0 0.0
  %2022 = vmatpush1.msra.mxu0 0.0
  %2023 = vmatprep.subr.mxu0 0.0
  %2024 = vmatpush1.msra.mxu0 0.0
  %2025 = vmatprep.subr.mxu0 0.0
  %2026 = vmatpush1.msra.mxu0 0.0
  %2027 = vmatprep.subr.mxu0 0.0
  %2028 = vmatpush1.msra.mxu0 0.0
  %2029 = vmatprep.subr.mxu0 0.0
  %2030 = vmatpush1.msra.mxu0 0.0
  %2031 = vmatprep.mubr.f32.mxu0 0.0
  %2032 = vmatmul.mubr.f32.gmra.mrb[0].mxu0 %v1962
  %v2033 = vpop.f32.mrb[0].mxu0
  %v2034 = vadd.f32 %v1398, %v2033
  %v2035 = vpop.f32.mrb[0].mxu0
  %2036 = vmatprep.mubr.f32.mxu0 0.0
  %2037 = vmatmul.mubr.f32.gmra.mrb[0].mxu0 %v1965
  %v2038 = vpop.f32.mrb[0].mxu0
  %v2039 = vadd.f32 %v1398, %v2038
  %v2040 = vpop.f32.mrb[0].mxu0
  %2041 = vdwg.mxu0
  %2042 = vmatprep.subr.mxu0 0.0
  %2043 = vmatpush1.msra.mxu0 %v1070
  %2044 = vmatprep.subr.mxu0 0.0
  %2045 = vmatpush1.msra.mxu0 %v1071
  %2046 = vmatprep.subr.mxu0 0.0
  %2047 = vmatpush1.msra.mxu0 %v1072
  %2048 = vmatprep.subr.mxu0 0.0
  %2049 = vmatpush1.msra.mxu0 %v1073
  %2050 = vmatprep.subr.mxu0 0.0
  %2051 = vmatpush1.msra.mxu0 %v1074
  %2052 = vmatprep.subr.mxu0 0.0
  %2053 = vmatpush1.msra.mxu0 %v1075
  %2054 = vmatprep.subr.mxu0 0.0
  %2055 = vmatpush1.msra.mxu0 %v1485
  %2056 = vmatprep.subr.mxu0 0.0
  %2057 = vmatpush1.msra.mxu0 0.0
  %2058 = vmatprep.subr.mxu0 0.0
  %2059 = vmatpush1.msra.mxu0 0.0
  %2060 = vmatprep.subr.mxu0 0.0
  %2061 = vmatpush1.msra.mxu0 0.0
  %2062 = vmatprep.subr.mxu0 0.0
  %2063 = vmatpush1.msra.mxu0 0.0
  %2064 = vmatprep.subr.mxu0 0.0
  %2065 = vmatpush1.msra.mxu0 0.0
  %2066 = vmatprep.subr.mxu0 0.0
  %2067 = vmatpush1.msra.mxu0 0.0
  %2068 = vmatprep.subr.mxu0 0.0
  %2069 = vmatpush1.msra.mxu0 0.0
  %2070 = vmatprep.subr.mxu0 0.0
  %2071 = vmatpush1.msra.mxu0 0.0
  %2072 = vmatprep.subr.mxu0 0.0
  %2073 = vmatpush1.msra.mxu0 0.0
  %2074 = vmatprep.subr.mxu0 0.0
  %2075 = vmatpush1.msra.mxu0 0.0
  %2076 = vmatprep.subr.mxu0 0.0
  %2077 = vmatpush1.msra.mxu0 0.0
  %2078 = vmatprep.subr.mxu0 0.0
  %2079 = vmatpush1.msra.mxu0 0.0
  %2080 = vmatprep.subr.mxu0 0.0
  %2081 = vmatpush1.msra.mxu0 0.0
  %2082 = vmatprep.subr.mxu0 0.0
  %2083 = vmatpush1.msra.mxu0 0.0
  %2084 = vmatprep.subr.mxu0 0.0
  %2085 = vmatpush1.msra.mxu0 0.0
  %2086 = vmatprep.subr.mxu0 0.0
  %2087 = vmatpush1.msra.mxu0 0.0
  %2088 = vmatprep.subr.mxu0 0.0
  %2089 = vmatpush1.msra.mxu0 0.0
  %2090 = vmatprep.subr.mxu0 0.0
  %2091 = vmatpush1.msra.mxu0 0.0
  %2092 = vmatprep.subr.mxu0 0.0
  %2093 = vmatpush1.msra.mxu0 0.0
  %2094 = vmatprep.subr.mxu0 0.0
  %2095 = vmatpush1.msra.mxu0 0.0
  %2096 = vmatprep.subr.mxu0 0.0
  %2097 = vmatpush1.msra.mxu0 0.0
  %2098 = vmatprep.subr.mxu0 0.0
  %2099 = vmatpush1.msra.mxu0 0.0
  %2100 = vmatprep.subr.mxu0 0.0
  %2101 = vmatpush1.msra.mxu0 0.0
  %2102 = vmatprep.subr.mxu0 0.0
  %2103 = vmatpush1.msra.mxu0 0.0
  %2104 = vmatprep.subr.mxu0 0.0
  %2105 = vmatpush1.msra.mxu0 0.0
  %2106 = vmatprep.mubr.f32.mxu0 0.0
  %2107 = vmatmul.mubr.f32.gmra.mrb[0].mxu0 %v1962
  %v2108 = vpop.f32.mrb[0].mxu0
  %v2109 = vadd.f32 %v1482, %v2108
  %v2110 = vpop.f32.mrb[0].mxu0
  %2111 = vmatprep.mubr.f32.mxu0 0.0
  %2112 = vmatmul.mubr.f32.gmra.mrb[0].mxu0 %v1965
  %v2113 = vpop.f32.mrb[0].mxu0
  %v2114 = vadd.f32 %v1482, %v2113
  %v2115 = vpop.f32.mrb[0].mxu0
  %2116 = vdwg.mxu0
  %2117 = vmatprep.subr.mxu0 0.0
  %2118 = vmatpush1.msra.mxu0 %v1078
  %2119 = vmatprep.subr.mxu0 0.0
  %2120 = vmatpush1.msra.mxu0 %v1079
  %2121 = vmatprep.subr.mxu0 0.0
  %2122 = vmatpush1.msra.mxu0 %v1080
  %2123 = vmatprep.subr.mxu0 0.0
  %2124 = vmatpush1.msra.mxu0 %v1081
  %2125 = vmatprep.subr.mxu0 0.0
  %2126 = vmatpush1.msra.mxu0 %v1082
  %2127 = vmatprep.subr.mxu0 0.0
  %2128 = vmatpush1.msra.mxu0 %v1083
  %2129 = vmatprep.subr.mxu0 0.0
  %2130 = vmatpush1.msra.mxu0 %v1569
  %2131 = vmatprep.subr.mxu0 0.0
  %2132 = vmatpush1.msra.mxu0 0.0
  %2133 = vmatprep.subr.mxu0 0.0
  %2134 = vmatpush1.msra.mxu0 0.0
  %2135 = vmatprep.subr.mxu0 0.0
  %2136 = vmatpush1.msra.mxu0 0.0
  %2137 = vmatprep.subr.mxu0 0.0
  %2138 = vmatpush1.msra.mxu0 0.0
  %2139 = vmatprep.subr.mxu0 0.0
  %2140 = vmatpush1.msra.mxu0 0.0
  %2141 = vmatprep.subr.mxu0 0.0
  %2142 = vmatpush1.msra.mxu0 0.0
  %2143 = vmatprep.subr.mxu0 0.0
  %2144 = vmatpush1.msra.mxu0 0.0
  %2145 = vmatprep.subr.mxu0 0.0
  %2146 = vmatpush1.msra.mxu0 0.0
  %2147 = vmatprep.subr.mxu0 0.0
  %2148 = vmatpush1.msra.mxu0 0.0
  %2149 = vmatprep.subr.mxu0 0.0
  %2150 = vmatpush1.msra.mxu0 0.0
  %2151 = vmatprep.subr.mxu0 0.0
  %2152 = vmatpush1.msra.mxu0 0.0
  %2153 = vmatprep.subr.mxu0 0.0
  %2154 = vmatpush1.msra.mxu0 0.0
  %2155 = vmatprep.subr.mxu0 0.0
  %2156 = vmatpush1.msra.mxu0 0.0
  %2157 = vmatprep.subr.mxu0 0.0
  %2158 = vmatpush1.msra.mxu0 0.0
  %2159 = vmatprep.subr.mxu0 0.0
  %2160 = vmatpush1.msra.mxu0 0.0
  %2161 = vmatprep.subr.mxu0 0.0
  %2162 = vmatpush1.msra.mxu0 0.0
  %2163 = vmatprep.subr.mxu0 0.0
  %2164 = vmatpush1.msra.mxu0 0.0
  %2165 = vmatprep.subr.mxu0 0.0
  %2166 = vmatpush1.msra.mxu0 0.0
  %2167 = vmatprep.subr.mxu0 0.0
  %2168 = vmatpush1.msra.mxu0 0.0
  %2169 = vmatprep.subr.mxu0 0.0
  %2170 = vmatpush1.msra.mxu0 0.0
  %2171 = vmatprep.subr.mxu0 0.0
  %2172 = vmatpush1.msra.mxu0 0.0
  %2173 = vmatprep.subr.mxu0 0.0
  %2174 = vmatpush1.msra.mxu0 0.0
  %2175 = vmatprep.subr.mxu0 0.0
  %2176 = vmatpush1.msra.mxu0 0.0
  %2177 = vmatprep.subr.mxu0 0.0
  %2178 = vmatpush1.msra.mxu0 0.0
  %2179 = vmatprep.subr.mxu0 0.0
  %2180 = vmatpush1.msra.mxu0 0.0
  %2181 = vmatprep.mubr.f32.mxu0 0.0
  %2182 = vmatmul.mubr.f32.gmra.mrb[0].mxu0 %v1962
  %v2183 = vpop.f32.mrb[0].mxu0
  %v2184 = vadd.f32 %v1566, %v2183
  %v2185 = vpop.f32.mrb[0].mxu0
  %2186 = vmatprep.mubr.f32.mxu0 0.0
  %2187 = vmatmul.mubr.f32.gmra.mrb[0].mxu0 %v1965
  %v2188 = vpop.f32.mrb[0].mxu0
  %v2189 = vadd.f32 %v1566, %v2188
  %v2190 = vpop.f32.mrb[0].mxu0
  %2191 = vdwg.mxu0
  %v2192 = vadd.f32 %v822, %v2034
  %v2193 = vadd.f32 %v827, %v2039
  %v2194 = vxor.u32 %v2192, 2147483648
  %v2195 = vxor.u32 %v2193, 2147483648
  %v2196 = vmul.f32 %v2194, 1.442695
  %v2197 = vpow.pop %v2196
  %v2198 = vmul.f32 %v2195, 1.442695
  %v2199 = vpow.pop %v2198
  %v2200 = vadd.f32 %v2197, 1.0
  %v2201 = vadd.f32 %v2199, 1.0
  %v2202 = vrcp.pop %v2200
  %v2203 = vmul.f32 1.0, %v2202
  %v2204 = vrcp.pop %v2201
  %v2205 = vmul.f32 1.0, %v2204
  %v2206 = vadd.f32 %v921, %v2109
  %v2207 = vadd.f32 %v926, %v2114
  %v2208 = vxor.u32 %v2206, 2147483648
  %v2209 = vxor.u32 %v2207, 2147483648
  %v2210 = vmul.f32 %v2208, 1.442695
  %v2211 = vpow.pop %v2210
  %v2212 = vmul.f32 %v2209, 1.442695
  %v2213 = vpow.pop %v2212
  %v2214 = vadd.f32 %v2211, 1.0
  %v2215 = vadd.f32 %v2213, 1.0
  %v2216 = vrcp.pop %v2214
  %v2217 = vmul.f32 1.0, %v2216
  %v2218 = vrcp.pop %v2215
  %v2219 = vmul.f32 1.0, %v2218
  %v2220 = vmul.f32 %v2203, %v2184
  %v2221 = vmul.f32 %v2205, %v2189
  %v2222 = vadd.f32 %v1020, %v2220
  %v2223 = vadd.f32 %v1025, %v2221
  %v2224 = vtanh.pop %v2222
  %v2225 = vtanh.pop %v2223
  %v2226 = vsub.f32 1.0, %v2217
  %v2227 = vsub.f32 1.0, %v2219
  %v2228 = vmul.f32 %v2226, %v2224
  %v2229 = vmul.f32 %v2227, %v2225
  %v2230 = vmul.f32 %v2217, %v1686
  %v2231 = vmul.f32 %v2219, %v1687
  %v2232 = vadd.f32 %v2228, %v2230
  %v2233 = vadd.f32 %v2229, %v2231
  %v2234 = vld [vmem:[%s6] sm:$0xff]
  %v2235 = vld [vmem:[%s6 + $0x8] sm:$0xff]
  %v2236 = vld [vmem:[%s6 + $0x10] sm:$0xff]
  %v2237 = vld [vmem:[%s6 + $0x18] sm:$0xff]
  %v2238 = vld [vmem:[%s6 + $0x20] sm:$0xff]
  %v2239 = vld [vmem:[%s6 + $0x28] sm:$0xff]
  %v2240 = vld [vmem:[%s6 + $0x30] sm:$0x3]
  %s2241 = scalar_lea.vmem %s6, 56
  %v2242 = vld [vmem:[%s2241] sm:$0xff]
  %v2243 = vld [vmem:[%s2241 + $0x8] sm:$0xff]
  %v2244 = vld [vmem:[%s2241 + $0x10] sm:$0xff]
  %v2245 = vld [vmem:[%s2241 + $0x18] sm:$0xff]
  %v2246 = vld [vmem:[%s2241 + $0x20] sm:$0xff]
  %v2247 = vld [vmem:[%s2241 + $0x28] sm:$0xff]
  %v2248 = vld [vmem:[%s2241 + $0x30] sm:$0x3]
  %v2250 = vsel %vm1102, %v1959, 0
  %v2253 = vsel %vm1102, %v1960, 0
  %v2256 = vsel %vm454, %v2248, 0
  %2258 = vmatprep.subr.mxu0 0.0
  %2259 = vmatpush1.msra.mxu0 %v2242
  %2260 = vmatprep.subr.mxu0 0.0
  %2261 = vmatpush1.msra.mxu0 %v2243
  %2262 = vmatprep.subr.mxu0 0.0
  %2263 = vmatpush1.msra.mxu0 %v2244
  %2264 = vmatprep.subr.mxu0 0.0
  %2265 = vmatpush1.msra.mxu0 %v2245
  %2266 = vmatprep.subr.mxu0 0.0
  %2267 = vmatpush1.msra.mxu0 %v2246
  %2268 = vmatprep.subr.mxu0 0.0
  %2269 = vmatpush1.msra.mxu0 %v2247
  %2270 = vmatprep.subr.mxu0 0.0
  %2271 = vmatpush1.msra.mxu0 %v2256
  %2272 = vmatprep.subr.mxu0 0.0
  %2273 = vmatpush1.msra.mxu0 0.0
  %2274 = vmatprep.subr.mxu0 0.0
  %2275 = vmatpush1.msra.mxu0 0.0
  %2276 = vmatprep.subr.mxu0 0.0
  %2277 = vmatpush1.msra.mxu0 0.0
  %2278 = vmatprep.subr.mxu0 0.0
  %2279 = vmatpush1.msra.mxu0 0.0
  %2280 = vmatprep.subr.mxu0 0.0
  %2281 = vmatpush1.msra.mxu0 0.0
  %2282 = vmatprep.subr.mxu0 0.0
  %2283 = vmatpush1.msra.mxu0 0.0
  %2284 = vmatprep.subr.mxu0 0.0
  %2285 = vmatpush1.msra.mxu0 0.0
  %2286 = vmatprep.subr.mxu0 0.0
  %2287 = vmatpush1.msra.mxu0 0.0
  %2288 = vmatprep.subr.mxu0 0.0
  %2289 = vmatpush1.msra.mxu0 0.0
  %2290 = vmatprep.subr.mxu0 0.0
  %2291 = vmatpush1.msra.mxu0 0.0
  %2292 = vmatprep.subr.mxu0 0.0
  %2293 = vmatpush1.msra.mxu0 0.0
  %2294 = vmatprep.subr.mxu0 0.0
  %2295 = vmatpush1.msra.mxu0 0.0
  %2296 = vmatprep.subr.mxu0 0.0
  %2297 = vmatpush1.msra.mxu0 0.0
  %2298 = vmatprep.subr.mxu0 0.0
  %2299 = vmatpush1.msra.mxu0 0.0
  %2300 = vmatprep.subr.mxu0 0.0
  %2301 = vmatpush1.msra.mxu0 0.0
  %2302 = vmatprep.subr.mxu0 0.0
  %2303 = vmatpush1.msra.mxu0 0.0
  %2304 = vmatprep.subr.mxu0 0.0
  %2305 = vmatpush1.msra.mxu0 0.0
  %2306 = vmatprep.subr.mxu0 0.0
  %2307 = vmatpush1.msra.mxu0 0.0
  %2308 = vmatprep.subr.mxu0 0.0
  %2309 = vmatpush1.msra.mxu0 0.0
  %2310 = vmatprep.subr.mxu0 0.0
  %2311 = vmatpush1.msra.mxu0 0.0
  %2312 = vmatprep.subr.mxu0 0.0
  %2313 = vmatpush1.msra.mxu0 0.0
  %2314 = vmatprep.subr.mxu0 0.0
  %2315 = vmatpush1.msra.mxu0 0.0
  %2316 = vmatprep.subr.mxu0 0.0
  %2317 = vmatpush1.msra.mxu0 0.0
  %2318 = vmatprep.subr.mxu0 0.0
  %2319 = vmatpush1.msra.mxu0 0.0
  %2320 = vmatprep.subr.mxu0 0.0
  %2321 = vmatpush1.msra.mxu0 0.0
  %2322 = vmatprep.mubr.f32.mxu0 0.0
  %2323 = vmatmul.mubr.f32.gmra.mrb[0].mxu0 %v2250
  %v2324 = vpop.f32.mrb[0].mxu0
  %v2325 = vadd.f32 0.0, %v2324
  %v2326 = vpop.f32.mrb[0].mxu0
  %2327 = vmatprep.mubr.f32.mxu0 0.0
  %2328 = vmatmul.mubr.f32.gmra.mrb[0].mxu0 %v2253
  %v2329 = vpop.f32.mrb[0].mxu0
  %v2330 = vadd.f32 0.0, %v2329
  %v2331 = vpop.f32.mrb[0].mxu0
  %2332 = vdwg.mxu0
  %v2334 = vsel %vm1102, %v2232, 0
  %v2337 = vsel %vm1102, %v2233, 0
  %v2340 = vsel %vm454, %v2240, 0
  %2342 = vmatprep.subr.mxu0 0.0
  %2343 = vmatpush1.msra.mxu0 %v2234
  %2344 = vmatprep.subr.mxu0 0.0
  %2345 = vmatpush1.msra.mxu0 %v2235
  %2346 = vmatprep.subr.mxu0 0.0
  %2347 = vmatpush1.msra.mxu0 %v2236
  %2348 = vmatprep.subr.mxu0 0.0
  %2349 = vmatpush1.msra.mxu0 %v2237
  %2350 = vmatprep.subr.mxu0 0.0
  %2351 = vmatpush1.msra.mxu0 %v2238
  %2352 = vmatprep.subr.mxu0 0.0
  %2353 = vmatpush1.msra.mxu0 %v2239
  %2354 = vmatprep.subr.mxu0 0.0
  %2355 = vmatpush1.msra.mxu0 %v2340
  %2356 = vmatprep.subr.mxu0 0.0
  %2357 = vmatpush1.msra.mxu0 0.0
  %2358 = vmatprep.subr.mxu0 0.0
  %2359 = vmatpush1.msra.mxu0 0.0
  %2360 = vmatprep.subr.mxu0 0.0
  %2361 = vmatpush1.msra.mxu0 0.0
  %2362 = vmatprep.subr.mxu0 0.0
  %2363 = vmatpush1.msra.mxu0 0.0
  %2364 = vmatprep.subr.mxu0 0.0
  %2365 = vmatpush1.msra.mxu0 0.0
  %2366 = vmatprep.subr.mxu0 0.0
  %2367 = vmatpush1.msra.mxu0 0.0
  %2368 = vmatprep.subr.mxu0 0.0
  %2369 = vmatpush1.msra.mxu0 0.0
  %2370 = vmatprep.subr.mxu0 0.0
  %2371 = vmatpush1.msra.mxu0 0.0
  %2372 = vmatprep.subr.mxu0 0.0
  %2373 = vmatpush1.msra.mxu0 0.0
  %2374 = vmatprep.subr.mxu0 0.0
  %2375 = vmatpush1.msra.mxu0 0.0
  %2376 = vmatprep.subr.mxu0 0.0
  %2377 = vmatpush1.msra.mxu0 0.0
  %2378 = vmatprep.subr.mxu0 0.0
  %2379 = vmatpush1.msra.mxu0 0.0
  %2380 = vmatprep.subr.mxu0 0.0
  %2381 = vmatpush1.msra.mxu0 0.0
  %2382 = vmatprep.subr.mxu0 0.0
  %2383 = vmatpush1.msra.mxu0 0.0
  %2384 = vmatprep.subr.mxu0 0.0
  %2385 = vmatpush1.msra.mxu0 0.0
  %2386 = vmatprep.subr.mxu0 0.0
  %2387 = vmatpush1.msra.mxu0 0.0
  %2388 = vmatprep.subr.mxu0 0.0
  %2389 = vmatpush1.msra.mxu0 0.0
  %2390 = vmatprep.subr.mxu0 0.0
  %2391 = vmatpush1.msra.mxu0 0.0
  %2392 = vmatprep.subr.mxu0 0.0
  %2393 = vmatpush1.msra.mxu0 0.0
  %2394 = vmatprep.subr.mxu0 0.0
  %2395 = vmatpush1.msra.mxu0 0.0
  %2396 = vmatprep.subr.mxu0 0.0
  %2397 = vmatpush1.msra.mxu0 0.0
  %2398 = vmatprep.subr.mxu0 0.0
  %2399 = vmatpush1.msra.mxu0 0.0
  %2400 = vmatprep.subr.mxu0 0.0
  %2401 = vmatpush1.msra.mxu0 0.0
  %2402 = vmatprep.subr.mxu0 0.0
  %2403 = vmatpush1.msra.mxu0 0.0
  %2404 = vmatprep.subr.mxu0 0.0
  %2405 = vmatpush1.msra.mxu0 0.0
  %2406 = vmatprep.mubr.f32.mxu0 0.0
  %2407 = vmatmul.mubr.f32.gmra.mrb[0].mxu0 %v2334
  %v2408 = vpop.f32.mrb[0].mxu0
  %v2409 = vadd.f32 %v2325, %v2408
  %v2410 = vpop.f32.mrb[0].mxu0
  %2411 = vmatprep.mubr.f32.mxu0 0.0
  %2412 = vmatmul.mubr.f32.gmra.mrb[0].mxu0 %v2337
  %v2413 = vpop.f32.mrb[0].mxu0
  %v2414 = vadd.f32 %v2330, %v2413
  %v2415 = vpop.f32.mrb[0].mxu0
  %2416 = vdwg.mxu0
  %v2417 = vld [vmem:[%s7] sm:$0x1]
  %v2419 = vlaneseq
  %v2420 = vshrl.u32 %v2419, 7
  %v2421 = vsub.s32 0, %v2420
  %v2422 = vrot.slane %v2417, %v2421
  %v2424 = vadd.f32 %v2409, %v2422
  %v2425 = vadd.f32 %v2414, %v2422
  %vm2426 = vcmask 15360
  %2427 = vst.msk [vmem:[%s8] sm:$0xff] %vm2426, %v2424
  %2428 = vst.msk [vmem:[%s8 + $0x8] sm:$0xff] %vm2426, %v2425
  // Predicated region
  $region34: #{rnn_attn_forward.1} parent=0 // pred_check
    _
  $region35: #{rnn_attn_forward.1} parent=0 // pred_check_branch
    %2430 = sbr.rel (0) target = $region37
  $region36: #{rnn_attn_forward.1} parent=0 // pred_region
    _
  $region37: #{rnn_attn_forward.1} parent=0 // pred_fallthru
    _
  // Predicated region
  $region38: #{rnn_attn_forward.1} parent=0 // pred_check
    _
  $region39: #{rnn_attn_forward.1} parent=0 // pred_check_branch
    %2432 = sbr.rel (0) target = $region41
  $region40: #{rnn_attn_forward.1} parent=0 // pred_region
    _
  $region41: #{rnn_attn_forward.1} parent=0 // pred_fallthru
    _

</llo_original>
